<compile_context>
chip_gen: v5e
topology: v5e:2x2
jax: 0.10.0
libtpu: 0.0.40
codegen_flags: <defaults>
</compile_context>

<pallas_src>
import jax
import jax.numpy as jnp
from jax.experimental import pallas as pl
from jax.experimental.pallas import tpu as pltpu


def _merge_mlp_kernel(x1_ref, x2_ref, w1a_ref, w1b_ref, b1_ref,
                      w2_ref, b2_ref, o_ref):
    """fc1(+split concat) -> ReLU -> fc2 for one batch tile, fully on-chip."""
    cdt = w1a_ref.dtype  # MXU compute dtype (bf16 by default)

    x1 = x1_ref[...]
    x2 = x2_ref[...]
    if x1.dtype != cdt:          # free VPU filler if caller passed f32
        x1 = x1.astype(cdt)
        x2 = x2.astype(cdt)

    # [x1 | x2] @ w1 == x1 @ w1a + x2 @ w1b  (f32 accumulation on the MXU).
    h = jnp.dot(x1, w1a_ref[...], preferred_element_type=jnp.float32)
    h = h + jnp.dot(x2, w1b_ref[...], preferred_element_type=jnp.float32)

    # Bias add + ReLU in f32 on the VPU.
    h = jnp.maximum(h + b1_ref[...], 0.0)

    # fc2 on the MXU, f32 accumulation, f32 bias, store in output dtype.
    y = jnp.dot(h.astype(cdt), w2_ref[...], preferred_element_type=jnp.float32)
    o_ref[...] = (y + b2_ref[...]).astype(o_ref.dtype)


def prepare_merge_params(w1, b1, w2, b2, dim1, compute_dtype=jnp.bfloat16):
    """One-time weight preprocessing (layout plumbing, done once per model).

    w1: [dim1+dim2, dim3]  (already transposed vs torch.nn.Linear)
    b1: [dim3] or [1, dim3]
    w2: [dim3, dim4]
    b2: [dim4] or [1, dim4]

    Returns (w1a, w1b, b1, w2, b2):
      * fc1 weight split at dim1 so the kernel never needs the concat,
      * weights cast to the MXU compute dtype (bf16 by default; pass
        jnp.float32 for tighter parity — the kernel is memory-bound anyway),
      * biases kept in f32 with shape [1, d],
      * fc2 weight/bias left at their true width (no lane padding: at tiny d4
        the 4x write amplification costs more than the masked store).
    """
    d3 = w1.shape[1]
    d4 = w2.shape[1]

    w1a = w1[:dim1].astype(compute_dtype)
    w1b = w1[dim1:].astype(compute_dtype)
    b1p = jnp.asarray(b1, jnp.float32).reshape(1, d3)
    w2c = w2.astype(compute_dtype)
    b2p = jnp.asarray(b2, jnp.float32).reshape(1, d4)
    return w1a, w1b, b1p, w2c, b2p


def _pick_batch_tile(B, bytes_per_row_io, block_batch):
    """Batch tile: as large as possible while (a) keeping >=4 grid steps for
    large B (so v7x's 2 TCs both get work and DMA still pipelines) and
    (b) keeping double-buffered I/O tiles well under every generation's
    default scoped VMEM (16 MiB on v5e, 32 MiB on v6e/v7x, 64 MiB phys v7x)."""
    tb = min(block_batch, B)
    if tb == B and B >= 1024:
        tb = -(-B // 4)  # ceil(B/4): keep the parallel axis populated
    vmem_budget = 12 * 1024 * 1024
    tb = min(tb, max(8, vmem_budget // max(1, 2 * bytes_per_row_io)))
    if tb < B:
        tb = max(8, (tb // 8) * 8)  # sublane-aligned
    return tb


def merge_layer_forward(x1, x2, params, *, block_batch=512, out_dtype=None):
    """Pallas MergeLayer forward.

    x1: [B, dim1], x2: [B, dim2]  (bf16 preferred: halves the dominant HBM
        read stream; f32 also accepted and cast in-kernel).
    params: output of prepare_merge_params
    returns: [B, dim4] in `out_dtype` (defaults to x1.dtype).
    """
    w1a, w1b, b1, w2, b2 = params
    B, dim1 = x1.shape
    dim2 = x2.shape[1]
    d3 = w1a.shape[1]
    d4 = w2.shape[1]
    if out_dtype is None:
        out_dtype = x1.dtype

    x_isz = jnp.dtype(x1.dtype).itemsize
    o_isz = jnp.dtype(out_dtype).itemsize
    bytes_per_row_io = (dim1 + dim2) * x_isz + d4 * o_isz
    tb = _pick_batch_tile(B, bytes_per_row_io, block_batch)
    n_steps = pl.cdiv(B, tb)   # ragged tail handled by Pallas partial-block masking

    weight_bytes = sum(int(a.size) * jnp.dtype(a.dtype).itemsize
                       for a in (w1a, w1b, b1, w2, b2))
    cost = pl.CostEstimate(
        flops=2 * B * ((dim1 + dim2) * d3 + d3 * d4),
        transcendentals=0,
        bytes_accessed=B * bytes_per_row_io + weight_bytes,
    )

    return pl.pallas_call(
        _merge_mlp_kernel,
        out_shape=jax.ShapeDtypeStruct((B, d4), out_dtype),
        grid_spec=pltpu.PrefetchScalarGridSpec(
            num_scalar_prefetch=0,
            grid=(n_steps,),
            in_specs=[
                # Activations: one batch tile per grid step (pipelined DMA).
                # If profiles still show exposed input DMA, add
                # pipeline_mode=pl.Buffered(3) to these two specs.
                pl.BlockSpec((tb, dim1), lambda i: (i, 0)),
                pl.BlockSpec((tb, dim2), lambda i: (i, 0)),
                # Weights / biases: constant block index -> VMEM-resident.
                pl.BlockSpec((dim1, d3), lambda i: (0, 0)),
                pl.BlockSpec((dim2, d3), lambda i: (0, 0)),
                pl.BlockSpec((1, d3), lambda i: (0, 0)),
                pl.BlockSpec((d3, d4), lambda i: (0, 0)),
                pl.BlockSpec((1, d4), lambda i: (0, 0)),
            ],
            out_specs=pl.BlockSpec((tb, d4), lambda i: (i, 0)),
        ),
        compiler_params=pltpu.CompilerParams(
            # Independent batch tiles: shards across v7x's 2 TensorCores,
            # harmless on v5e/v6e.
            dimension_semantics=("parallel",),
            # Explicit scoped-VMEM budget: safe on all generations (tile cap
            # above keeps double-buffered usage <= ~12 MiB + weights).
            vmem_limit_bytes=32 * 1024 * 1024,
        ),
        cost_estimate=cost,
    )(x1, x2, w1a, w1b, b1, w2, b2)


def init_merge_layer_params(key, dim1, dim2, dim3, dim4, dtype=jnp.float32):
    """Deterministic parameter init matching MergeLayer.__init__.

    fc1.weight: xavier_normal over [dim3, dim1+dim2] -> stored transposed [dim1+dim2, dim3]
    fc2.weight: xavier_normal over [dim4, dim3]      -> stored transposed [dim3, dim4]
    biases: torch Linear default (uniform), drawn deterministically here.
    """
    k1, k2, k3, k4 = jax.random.split(key, 4)
    fan_in1, fan_out1 = dim1 + dim2, dim3
    std1 = (2.0 / (fan_in1 + fan_out1)) ** 0.5
    w1 = std1 * jax.random.normal(k1, (fan_in1, fan_out1), dtype=dtype)
    bound1 = 1.0 / (fan_in1 ** 0.5)
    b1 = jax.random.uniform(k3, (1, fan_out1), dtype=dtype,
                            minval=-bound1, maxval=bound1)

    fan_in2, fan_out2 = dim3, dim4
    std2 = (2.0 / (fan_in2 + fan_out2)) ** 0.5
    w2 = std2 * jax.random.normal(k2, (fan_in2, fan_out2), dtype=dtype)
    bound2 = 1.0 / (fan_in2 ** 0.5)
    b2 = jax.random.uniform(k4, (1, fan_out2), dtype=dtype,
                            minval=-bound2, maxval=bound2)
    return w1, b1, w2, b2


def _reference(x1, x2, w1, b1, w2, b2):
    """Pure-JAX f32 reference of the PyTorch forward."""
    x = jnp.concatenate([x1.astype(jnp.float32), x2.astype(jnp.float32)], axis=1)
    h = jnp.maximum(x @ w1 + b1, 0.0)
    return h @ w2 + b2


if __name__ == "__main__":
    dim1, dim2, dim3, dim4 = 64, 64, 128, 32

    key = jax.random.PRNGKey(0)
    kx1, kx2, kp = jax.random.split(key, 3)
    w1, b1, w2, b2 = init_merge_layer_params(kp, dim1, dim2, dim3, dim4)
    params = prepare_merge_params(w1, b1, w2, b2, dim1)

    # Case 1: B divisible by the tile -> 4 grid steps of 512 rows each.
    # Activations in bf16 (halves the dominant HBM read stream).
    B = 2048
    x1 = jax.random.normal(kx1, (B, dim1), jnp.float32).astype(jnp.bfloat16)
    x2 = jax.random.normal(kx2, (B, dim2), jnp.float32).astype(jnp.bfloat16)

    out = merge_layer_forward(x1, x2, params, block_batch=512)
    jax.block_until_ready(out)
    assert out.shape == (B, dim4) and out.dtype == jnp.bfloat16

    ref = _reference(x1, x2, w1, b1, w2, b2)
    # bf16 MXU operands / bf16 output with f32 accumulation -> loosened tolerance.
    err = float(jnp.max(jnp.abs(out.astype(jnp.float32) - ref)))
    assert jnp.allclose(out.astype(jnp.float32), ref, atol=5e-2, rtol=5e-2), err

    # Case 2: ragged batch (B % tile != 0). No wrapper-side jnp.pad — Pallas
    # masks the partial last block; out-of-bounds rows are never written.
    B2 = 1000
    out2 = merge_layer_forward(x1[:B2], x2[:B2], params, block_batch=512)
    jax.block_until_ready(out2)
    assert out2.shape == (B2, dim4)
    err2 = float(jnp.max(jnp.abs(out2.astype(jnp.float32) - ref[:B2])))
    assert jnp.allclose(out2.astype(jnp.float32), ref[:B2],
                        atol=5e-2, rtol=5e-2), err2

    print("KERNEL_OK")
</pallas_src>

<mosaic_0001>
module attributes {stable_mosaic.version = 11 : i64} {
  func.func @_merge_mlp_kernel(%arg0: i32, %arg1: memref<512x64xbf16, #tpu.memory_space<vmem>>, %arg2: memref<512x64xbf16, #tpu.memory_space<vmem>>, %arg3: memref<64x128xbf16, #tpu.memory_space<vmem>>, %arg4: memref<64x128xbf16, #tpu.memory_space<vmem>>, %arg5: memref<1x128xf32, #tpu.memory_space<vmem>>, %arg6: memref<128x32xbf16, #tpu.memory_space<vmem>>, %arg7: memref<1x32xf32, #tpu.memory_space<vmem>>, %arg8: memref<512x32xbf16, #tpu.memory_space<vmem>>) attributes {dimension_semantics = [#tpu.dimension_semantics<parallel>], iteration_bounds = array<i64: 4>, scalar_prefetch = 0 : i64, scratch_operands = 0 : i64, tpu.core_type = #tpu.core_type<tc>, window_params = [{transform_indices = @transform_0, window_bounds = array<i64: 512, 64>}, {transform_indices = @transform_1, window_bounds = array<i64: 512, 64>}, {pipeline_mode = #tpu.pipeline_mode<synchronous>, transform_indices = @transform_2, window_bounds = array<i64: 64, 128>}, {pipeline_mode = #tpu.pipeline_mode<synchronous>, transform_indices = @transform_3, window_bounds = array<i64: 64, 128>}, {pipeline_mode = #tpu.pipeline_mode<synchronous>, transform_indices = @transform_4, window_bounds = array<i64: 1, 128>}, {pipeline_mode = #tpu.pipeline_mode<synchronous>, transform_indices = @transform_5, window_bounds = array<i64: 128, 32>}, {pipeline_mode = #tpu.pipeline_mode<synchronous>, transform_indices = @transform_6, window_bounds = array<i64: 1, 32>}, {transform_indices = @transform_7, window_bounds = array<i64: 512, 32>}]} {
    %c0 = arith.constant 0 : index
    %c0_0 = arith.constant 0 : index
    %0 = vector.load %arg1[%c0, %c0_0] : memref<512x64xbf16, #tpu.memory_space<vmem>>, vector<512x64xbf16>
    %c0_1 = arith.constant 0 : index
    %c0_2 = arith.constant 0 : index
    %1 = vector.load %arg2[%c0_1, %c0_2] : memref<512x64xbf16, #tpu.memory_space<vmem>>, vector<512x64xbf16>
    %c0_3 = arith.constant 0 : index
    %c0_4 = arith.constant 0 : index
    %2 = vector.load %arg3[%c0_3, %c0_4] : memref<64x128xbf16, #tpu.memory_space<vmem>>, vector<64x128xbf16>
    %cst = arith.constant dense<0.000000e+00> : vector<512x128xf32>
    %3 = tpu.matmul %0, %2, %cst {dimension_numbers = #tpu.dot_dimension_numbers<[1], [0], [0], [1], [0, 0, 1, 1], [], []>} : vector<512x64xbf16>, vector<64x128xbf16>, vector<512x128xf32> -> vector<512x128xf32>
    %c0_5 = arith.constant 0 : index
    %c0_6 = arith.constant 0 : index
    %4 = vector.load %arg4[%c0_5, %c0_6] : memref<64x128xbf16, #tpu.memory_space<vmem>>, vector<64x128xbf16>
    %cst_7 = arith.constant dense<0.000000e+00> : vector<512x128xf32>
    %5 = tpu.matmul %1, %4, %cst_7 {dimension_numbers = #tpu.dot_dimension_numbers<[1], [0], [0], [1], [0, 0, 1, 1], [], []>} : vector<512x64xbf16>, vector<64x128xbf16>, vector<512x128xf32> -> vector<512x128xf32>
    %6 = arith.addf %3, %5 : vector<512x128xf32>
    %c0_8 = arith.constant 0 : index
    %c0_9 = arith.constant 0 : index
    %7 = vector.load %arg5[%c0_8, %c0_9] : memref<1x128xf32, #tpu.memory_space<vmem>>, vector<1x128xf32>
    %8 = vector.broadcast %7 : vector<1x128xf32> to vector<512x128xf32>
    %9 = arith.addf %6, %8 : vector<512x128xf32>
    %cst_10 = arith.constant 0.000000e+00 : f32
    %10 = vector.broadcast %cst_10 : f32 to vector<512x128xf32>
    %11 = arith.maximumf %9, %10 : vector<512x128xf32>
    %12 = arith.truncf %11 : vector<512x128xf32> to vector<512x128xbf16>
    %c0_11 = arith.constant 0 : index
    %c0_12 = arith.constant 0 : index
    %13 = vector.load %arg6[%c0_11, %c0_12] : memref<128x32xbf16, #tpu.memory_space<vmem>>, vector<128x32xbf16>
    %cst_13 = arith.constant dense<0.000000e+00> : vector<512x32xf32>
    %14 = tpu.matmul %12, %13, %cst_13 {dimension_numbers = #tpu.dot_dimension_numbers<[1], [0], [0], [1], [0, 0, 1, 1], [], []>} : vector<512x128xbf16>, vector<128x32xbf16>, vector<512x32xf32> -> vector<512x32xf32>
    %c0_14 = arith.constant 0 : index
    %c0_15 = arith.constant 0 : index
    %15 = vector.load %arg7[%c0_14, %c0_15] : memref<1x32xf32, #tpu.memory_space<vmem>>, vector<1x32xf32>
    %16 = vector.broadcast %15 : vector<1x32xf32> to vector<512x32xf32>
    %17 = arith.addf %14, %16 : vector<512x32xf32>
    %18 = arith.truncf %17 : vector<512x32xf32> to vector<512x32xbf16>
    %c0_16 = arith.constant 0 : index
    %c0_17 = arith.constant 0 : index
    %19 = vector.load %arg8[%c0_16, %c0_17] : memref<512x32xbf16, #tpu.memory_space<vmem>>, vector<512x32xbf16>
    tpu.vector_store %arg8[%c0_16, %c0_17], %18 {strides = array<i32>} : memref<512x32xbf16, #tpu.memory_space<vmem>>, vector<512x32xbf16>,
    return
  }
  func.func @transform_0(%arg0: i32) -> (i32, i32) {
    %c0_i32 = arith.constant 0 : i32
    %c0_i32_0 = arith.constant 0 : i32
    return %arg0, %c0_i32 : i32, i32
  }
  func.func @transform_1(%arg0: i32) -> (i32, i32) {
    %c0_i32 = arith.constant 0 : i32
    %c0_i32_0 = arith.constant 0 : i32
    return %arg0, %c0_i32 : i32, i32
  }
  func.func @transform_2(%arg0: i32) -> (i32, i32) {
    %c0_i32 = arith.constant 0 : i32
    %c0_i32_0 = arith.constant 0 : i32
    %c0_i32_1 = arith.constant 0 : i32
    return %c0_i32, %c0_i32_0 : i32, i32
  }
  func.func @transform_3(%arg0: i32) -> (i32, i32) {
    %c0_i32 = arith.constant 0 : i32
    %c0_i32_0 = arith.constant 0 : i32
    %c0_i32_1 = arith.constant 0 : i32
    return %c0_i32, %c0_i32_0 : i32, i32
  }
  func.func @transform_4(%arg0: i32) -> (i32, i32) {
    %c0_i32 = arith.constant 0 : i32
    %c0_i32_0 = arith.constant 0 : i32
    %c0_i32_1 = arith.constant 0 : i32
    return %c0_i32, %c0_i32_0 : i32, i32
  }
  func.func @transform_5(%arg0: i32) -> (i32, i32) {
    %c0_i32 = arith.constant 0 : i32
    %c0_i32_0 = arith.constant 0 : i32
    %c0_i32_1 = arith.constant 0 : i32
    return %c0_i32, %c0_i32_0 : i32, i32
  }
  func.func @transform_6(%arg0: i32) -> (i32, i32) {
    %c0_i32 = arith.constant 0 : i32
    %c0_i32_0 = arith.constant 0 : i32
    %c0_i32_1 = arith.constant 0 : i32
    return %c0_i32, %c0_i32_0 : i32, i32
  }
  func.func @transform_7(%arg0: i32) -> (i32, i32) {
    %c0_i32 = arith.constant 0 : i32
    %c0_i32_0 = arith.constant 0 : i32
    return %arg0, %c0_i32 : i32, i32
  }
}

</mosaic_0001>

<llo_original>
// kernel: tpu_custom_call.1
$region0: #{tpu_custom_call.1}
  #allocation0 [shape = 'u32[]', space=smem, size = 0x4, offset = 0x4, fixed_abs, tag = 'smem constant byte address 0x4 - core index']
  #allocation1 [shape = 'u32[72,128]{1,0:T(1,128)}', space=vmem, size = 0x9000, scoped, tag = 'internal scratch']
  %s0 = inlined_call_operand.vmem [shape: bf16[2048,64], index: 0, kind: input, shape index: {}]
  %s1 = inlined_call_operand.vmem [shape: bf16[2048,64], index: 1, kind: input, shape index: {}]
  %s2 = inlined_call_operand.vmem [shape: bf16[64,128], index: 2, kind: input, shape index: {}]
  %s3 = inlined_call_operand.vmem [shape: bf16[64,128], index: 3, kind: input, shape index: {}]
  %s4 = inlined_call_operand.vmem [shape: f32[1,128], index: 4, kind: input, shape index: {}]
  %s5 = inlined_call_operand.vmem [shape: bf16[128,32], index: 5, kind: input, shape index: {}]
  %s6 = inlined_call_operand.vmem [shape: f32[1,32], index: 6, kind: input, shape index: {}]
  %s7 = inlined_call_operand.vmem [shape: bf16[2048,32], index: 7, kind: output, shape index: {}]
  %s8 = sld [smem:[#allocation0]]
  $region61: #{tpu_custom_call.1} parent=0
    _
  %s10 = ssub.s32 1, %s8
  %s11 = scalar_select 0, %s10, %s8
  loop: start=0, step=1, limit=6
  $region2: #{tpu_custom_call.1} parent=0 // loop_pre_header
    _
  $region3: #{tpu_custom_call.1} parent=0 // loop_header
    %s13 = sphi 0, %s17
    %p14 = scmp.ge.s32.totalorder %s13, 6
    %s23 = sphi 0, %s25
    %s26 = sphi 0, %s23
    %s27 = sphi 0, %s26
    %s43 = sphi 0, %s27
    %s49 = sphi 0, %s51
    %s52 = sphi 0, %s49
    %s53 = sphi 0, %s52
    %s69 = sphi 0, %s53
    %s73 = sphi 0, %s73
    %s75 = sphi 0, %s73
    %s76 = sphi 0, %s75
    %s90 = sphi 0, %s76
    %s94 = sphi 0, %s94
    %s96 = sphi 0, %s94
    %s97 = sphi 0, %s96
    %s111 = sphi 0, %s97
    %s115 = sphi 0, %s115
    %s117 = sphi 0, %s115
    %s118 = sphi 0, %s117
    %s132 = sphi 0, %s118
    %s136 = sphi 0, %s136
    %s138 = sphi 0, %s136
    %s139 = sphi 0, %s138
    %s153 = sphi 0, %s139
    %s157 = sphi 0, %s157
    %s159 = sphi 0, %s157
    %s160 = sphi 0, %s159
    %s174 = sphi 0, %s160
    %s180 = sphi 0, %s182
    %s183 = sphi 0, %s180
    %s184 = sphi 0, %s183
    %s200 = sphi 0, %s184
  $region4: #{tpu_custom_call.1} parent=0 // loop_header_branch
    %16 = sbr.rel (%p14) target = $region8
  $region5: #{tpu_custom_call.1} parent=0 // loop_body
    %s18 = ssub.s32 %s13, 1
    %s19 = ssub.s32 %s13, 2
    %s20 = sadd.s32 %s13, 1
    %s21 = ssub.s32 %s13, %s20
    %p22 = scmp.eq.s32.totalorder %s21, 0
    %s24 = sadd.s32 %s23, 1
    %s25 = scalar_select %p22, %s23, %s24
    %p28 = pneg %p22
    %p29 = scmp.eq.s32.totalorder %s13, 3
    %p30 = por %p28, %p29
    %p31 = scmp.ne.s32.totalorder %s23, %s26
    %p32 = scmp.eq.s32.totalorder %s13, 0
    %p33 = por %p31, %p32
    %p34 = scmp.ne.s32.totalorder %s23, %s26
    %p35 = scmp.eq.s32.totalorder %s18, 3
    %p36 = por %p34, %p35
    %p37 = scmp.ne.s32.totalorder %s26, %s27
    %p38 = scmp.eq.s32.totalorder %s18, 0
    %p39 = por %p37, %p38
    %p40 = scmp.ne.s32.totalorder %s26, %s27
    %p41 = scmp.eq.s32.totalorder %s19, 3
    %p42 = por %p40, %p41
    %p44 = scmp.ne.s32.totalorder %s27, %s43
    %p45 = scmp.eq.s32.totalorder %s19, 0
    %p46 = por %p44, %p45
    %s47 = ssub.s32 %s13, %s20
    %p48 = scmp.eq.s32.totalorder %s47, 0
    %s50 = sadd.s32 %s49, 1
    %s51 = scalar_select %p48, %s49, %s50
    %p54 = pneg %p48
    %p55 = scmp.eq.s32.totalorder %s13, 3
    %p56 = por %p54, %p55
    %p57 = scmp.ne.s32.totalorder %s49, %s52
    %p58 = scmp.eq.s32.totalorder %s13, 0
    %p59 = por %p57, %p58
    %p60 = scmp.ne.s32.totalorder %s49, %s52
    %p61 = scmp.eq.s32.totalorder %s18, 3
    %p62 = por %p60, %p61
    %p63 = scmp.ne.s32.totalorder %s52, %s53
    %p64 = scmp.eq.s32.totalorder %s18, 0
    %p65 = por %p63, %p64
    %p66 = scmp.ne.s32.totalorder %s52, %s53
    %p67 = scmp.eq.s32.totalorder %s19, 3
    %p68 = por %p66, %p67
    %p70 = scmp.ne.s32.totalorder %s53, %s69
    %p71 = scmp.eq.s32.totalorder %s19, 0
    %p72 = por %p70, %p71
    %s74 = sadd.s32 %s73, 1
    %p77 = scmp.eq.s32.totalorder %s13, 3
    %p78 = scmp.ne.s32.totalorder %s73, %s75
    %p79 = scmp.eq.s32.totalorder %s13, 0
    %p80 = por %p78, %p79
    %p81 = scmp.ne.s32.totalorder %s73, %s75
    %p82 = scmp.eq.s32.totalorder %s18, 3
    %p83 = por %p81, %p82
    %p84 = scmp.ne.s32.totalorder %s75, %s76
    %p85 = scmp.eq.s32.totalorder %s18, 0
    %p86 = por %p84, %p85
    %p87 = scmp.ne.s32.totalorder %s75, %s76
    %p88 = scmp.eq.s32.totalorder %s19, 3
    %p89 = por %p87, %p88
    %p91 = scmp.ne.s32.totalorder %s76, %s90
    %p92 = scmp.eq.s32.totalorder %s19, 0
    %p93 = por %p91, %p92
    %s95 = sadd.s32 %s94, 1
    %p98 = scmp.eq.s32.totalorder %s13, 3
    %p99 = scmp.ne.s32.totalorder %s94, %s96
    %p100 = scmp.eq.s32.totalorder %s13, 0
    %p101 = por %p99, %p100
    %p102 = scmp.ne.s32.totalorder %s94, %s96
    %p103 = scmp.eq.s32.totalorder %s18, 3
    %p104 = por %p102, %p103
    %p105 = scmp.ne.s32.totalorder %s96, %s97
    %p106 = scmp.eq.s32.totalorder %s18, 0
    %p107 = por %p105, %p106
    %p108 = scmp.ne.s32.totalorder %s96, %s97
    %p109 = scmp.eq.s32.totalorder %s19, 3
    %p110 = por %p108, %p109
    %p112 = scmp.ne.s32.totalorder %s97, %s111
    %p113 = scmp.eq.s32.totalorder %s19, 0
    %p114 = por %p112, %p113
    %s116 = sadd.s32 %s115, 1
    %p119 = scmp.eq.s32.totalorder %s13, 3
    %p120 = scmp.ne.s32.totalorder %s115, %s117
    %p121 = scmp.eq.s32.totalorder %s13, 0
    %p122 = por %p120, %p121
    %p123 = scmp.ne.s32.totalorder %s115, %s117
    %p124 = scmp.eq.s32.totalorder %s18, 3
    %p125 = por %p123, %p124
    %p126 = scmp.ne.s32.totalorder %s117, %s118
    %p127 = scmp.eq.s32.totalorder %s18, 0
    %p128 = por %p126, %p127
    %p129 = scmp.ne.s32.totalorder %s117, %s118
    %p130 = scmp.eq.s32.totalorder %s19, 3
    %p131 = por %p129, %p130
    %p133 = scmp.ne.s32.totalorder %s118, %s132
    %p134 = scmp.eq.s32.totalorder %s19, 0
    %p135 = por %p133, %p134
    %s137 = sadd.s32 %s136, 1
    %p140 = scmp.eq.s32.totalorder %s13, 3
    %p141 = scmp.ne.s32.totalorder %s136, %s138
    %p142 = scmp.eq.s32.totalorder %s13, 0
    %p143 = por %p141, %p142
    %p144 = scmp.ne.s32.totalorder %s136, %s138
    %p145 = scmp.eq.s32.totalorder %s18, 3
    %p146 = por %p144, %p145
    %p147 = scmp.ne.s32.totalorder %s138, %s139
    %p148 = scmp.eq.s32.totalorder %s18, 0
    %p149 = por %p147, %p148
    %p150 = scmp.ne.s32.totalorder %s138, %s139
    %p151 = scmp.eq.s32.totalorder %s19, 3
    %p152 = por %p150, %p151
    %p154 = scmp.ne.s32.totalorder %s139, %s153
    %p155 = scmp.eq.s32.totalorder %s19, 0
    %p156 = por %p154, %p155
    %s158 = sadd.s32 %s157, 1
    %p161 = scmp.eq.s32.totalorder %s13, 3
    %p162 = scmp.ne.s32.totalorder %s157, %s159
    %p163 = scmp.eq.s32.totalorder %s13, 0
    %p164 = por %p162, %p163
    %p165 = scmp.ne.s32.totalorder %s157, %s159
    %p166 = scmp.eq.s32.totalorder %s18, 3
    %p167 = por %p165, %p166
    %p168 = scmp.ne.s32.totalorder %s159, %s160
    %p169 = scmp.eq.s32.totalorder %s18, 0
    %p170 = por %p168, %p169
    %p171 = scmp.ne.s32.totalorder %s159, %s160
    %p172 = scmp.eq.s32.totalorder %s19, 3
    %p173 = por %p171, %p172
    %p175 = scmp.ne.s32.totalorder %s160, %s174
    %p176 = scmp.eq.s32.totalorder %s19, 0
    %p177 = por %p175, %p176
    %s178 = ssub.s32 %s13, %s20
    %p179 = scmp.eq.s32.totalorder %s178, 0
    %s181 = sadd.s32 %s180, 1
    %s182 = scalar_select %p179, %s180, %s181
    %p185 = pneg %p179
    %p186 = scmp.eq.s32.totalorder %s13, 3
    %p187 = por %p185, %p186
    %p188 = scmp.ne.s32.totalorder %s180, %s183
    %p189 = scmp.eq.s32.totalorder %s13, 0
    %p190 = por %p188, %p189
    %p191 = scmp.ne.s32.totalorder %s180, %s183
    %p192 = scmp.eq.s32.totalorder %s18, 3
    %p193 = por %p191, %p192
    %p194 = scmp.ne.s32.totalorder %s183, %s184
    %p195 = scmp.eq.s32.totalorder %s18, 0
    %p196 = por %p194, %p195
    %p197 = scmp.ne.s32.totalorder %s183, %s184
    %p198 = scmp.eq.s32.totalorder %s19, 3
    %p199 = por %p197, %p198
    %p201 = scmp.ne.s32.totalorder %s184, %s200
    %p202 = scmp.eq.s32.totalorder %s19, 0
    %p203 = por %p201, %p202
    %p204 = scmp.le.s32.totalorder 1, %s13
    %p205 = scmp.lt.s32.totalorder %s13, 5
    %p206 = pnand %p204, %p205
    %p207 = pneg %p206
    // Predicated region
    $region9: #{tpu_custom_call.1} parent=5 // pred_check
      _
    $region10: #{tpu_custom_call.1} parent=5 // pred_check_branch
      %209 = sbr.rel (%p206) target = $region12
    $region11: #{tpu_custom_call.1} parent=5 // pred_region
      %s210 = ssub.s32 %s13, 1
      // Predicated region
      $region13: #{tpu_custom_call.1} parent=11 // pred_check
        %p211 = pneg %p86
      $region14: #{tpu_custom_call.1} parent=11 // pred_check_branch
        %213 = sbr.rel (%p211) target = $region16
      $region15: #{tpu_custom_call.1} parent=11 // pred_region
        _
      $region16: #{tpu_custom_call.1} parent=11 // pred_fallthru
        _
      // Predicated region
      $region17: #{tpu_custom_call.1} parent=11 // pred_check
        %p214 = pneg %p107
      $region18: #{tpu_custom_call.1} parent=11 // pred_check_branch
        %216 = sbr.rel (%p214) target = $region20
      $region19: #{tpu_custom_call.1} parent=11 // pred_region
        _
      $region20: #{tpu_custom_call.1} parent=11 // pred_fallthru
        _
      // Predicated region
      $region21: #{tpu_custom_call.1} parent=11 // pred_check
        %p217 = pneg %p128
      $region22: #{tpu_custom_call.1} parent=11 // pred_check_branch
        %219 = sbr.rel (%p217) target = $region24
      $region23: #{tpu_custom_call.1} parent=11 // pred_region
        _
      $region24: #{tpu_custom_call.1} parent=11 // pred_fallthru
        _
      // Predicated region
      $region25: #{tpu_custom_call.1} parent=11 // pred_check
        %p220 = pneg %p149
      $region26: #{tpu_custom_call.1} parent=11 // pred_check_branch
        %222 = sbr.rel (%p220) target = $region28
      $region27: #{tpu_custom_call.1} parent=11 // pred_region
        _
      $region28: #{tpu_custom_call.1} parent=11 // pred_fallthru
        _
      // Predicated region
      $region29: #{tpu_custom_call.1} parent=11 // pred_check
        %p223 = pneg %p170
      $region30: #{tpu_custom_call.1} parent=11 // pred_check_branch
        %225 = sbr.rel (%p223) target = $region32
      $region31: #{tpu_custom_call.1} parent=11 // pred_region
        _
      $region32: #{tpu_custom_call.1} parent=11 // pred_fallthru
        _
    $region12: #{tpu_custom_call.1} parent=5 // pred_fallthru
      _
    %p226 = scmp.lt.s32.totalorder %s13, 4
    // Predicated region
    $region33: #{tpu_custom_call.1} parent=5 // pred_check
      %p227 = pneg %p226
    $region34: #{tpu_custom_call.1} parent=5 // pred_check_branch
      %229 = sbr.rel (%p227) target = $region36
    $region35: #{tpu_custom_call.1} parent=5 // pred_region
      // Predicated region
      $region37: #{tpu_custom_call.1} parent=35 // pred_check
        %p230 = pneg %p33
      $region38: #{tpu_custom_call.1} parent=35 // pred_check_branch
        %232 = sbr.rel (%p230) target = $region40
      $region39: #{tpu_custom_call.1} parent=35 // pred_region
        %s233 = smul.u32 64, %s13
        %p234 = scmp.lt.s32.totalorder %s233, 255
        %s235 = scalar_select %p234, %s233, 255
        %s236 = smul.addr %s235, 4
        %s237 = scalar_lea.vmem %s0, %s236
        %s238 = smul.u32 64, %s13
      $region40: #{tpu_custom_call.1} parent=35 // pred_fallthru
        _
      // Predicated region
      $region41: #{tpu_custom_call.1} parent=35 // pred_check
        %p239 = pneg %p59
      $region42: #{tpu_custom_call.1} parent=35 // pred_check_branch
        %241 = sbr.rel (%p239) target = $region44
      $region43: #{tpu_custom_call.1} parent=35 // pred_region
        %s242 = smul.u32 64, %s13
        %p243 = scmp.lt.s32.totalorder %s242, 255
        %s244 = scalar_select %p243, %s242, 255
        %s245 = smul.addr %s244, 4
        %s246 = scalar_lea.vmem %s1, %s245
        %s247 = smul.u32 64, %s13
      $region44: #{tpu_custom_call.1} parent=35 // pred_fallthru
        _
    $region36: #{tpu_custom_call.1} parent=5 // pred_fallthru
      _
    %p248 = scmp.le.s32.totalorder 1, %s13
    %p249 = scmp.lt.s32.totalorder %s13, 5
    %p250 = pnand %p248, %p249
    %p251 = pneg %p250
    // Predicated region
    $region45: #{tpu_custom_call.1} parent=5 // pred_check
      _
    $region46: #{tpu_custom_call.1} parent=5 // pred_check_branch
      %253 = sbr.rel (%p250) target = $region48
    $region47: #{tpu_custom_call.1} parent=5 // pred_region
      %s254 = ssub.s32 %s13, 1
      %s255 = smul.u32 64, %s18
      %p256 = scmp.lt.s32.totalorder %s255, 255
      %s257 = scalar_select %p256, %s255, 255
      %s258 = smul.addr %s257, 4
      %s259 = scalar_lea.vmem %s0, %s258
      %p260 = pneg %p39
      %p261 = pneg %p36
      %s262 = smul.u32 64, %s18
      %p263 = scmp.lt.s32.totalorder %s262, 255
      %s264 = scalar_select %p263, %s262, 255
      %s265 = smul.addr %s264, 4
      %s266 = scalar_lea.vmem %s1, %s265
      %p267 = pneg %p65
      %p268 = pneg %p62
      %p269 = pneg %p86
      %p270 = pneg %p83
      %p271 = pneg %p107
      %p272 = pneg %p104
      %p273 = pneg %p128
      %p274 = pneg %p125
      %p275 = pneg %p149
      %p276 = pneg %p146
      %p277 = pneg %p170
      %p278 = pneg %p167
      %p279 = pneg %p196
      %p280 = pneg %p193
      %s281 = smul.u32 64, %s18
      %p282 = scmp.lt.s32.totalorder %s281, 255
      %s283 = scalar_select %p282, %s281, 255
      %s284 = smul.addr %s283, 4
      %s285 = scalar_lea.vmem %s7, %s284
      %s286 = smul.u32 64, %s18
      %p287 = scmp.lt.s32.totalorder %s286, 255
      %s288 = scalar_select %p287, %s286, 255
      %s289 = smul.addr %s288, 4
      %s290 = scalar_lea.vmem %s0, %s289
      %s291 = smul.u32 64, %s18
      %s292 = smul.u32 64, %s18
      %p293 = scmp.lt.s32.totalorder %s292, 255
      %s294 = scalar_select %p293, %s292, 255
      %s295 = smul.addr %s294, 4
      %s296 = scalar_lea.vmem %s1, %s295
      %s297 = smul.u32 64, %s18
      %s298 = smul.u32 64, %s18
      %p299 = scmp.lt.s32.totalorder %s298, 255
      %s300 = scalar_select %p299, %s298, 255
      %s301 = smul.addr %s300, 4
      %s302 = scalar_lea.vmem %s7, %s301
      %s303 = smul.u32 64, %s18
      %v305 = vld [vmem:[%s290] sm:$0xf]
      %v306 = vld [vmem:[%s290 + $0x4] sm:$0xf]
      %v307 = vld [vmem:[%s290 + $0x8] sm:$0xf]
      %v308 = vld [vmem:[%s290 + $0xc] sm:$0xf]
      %v309 = vld [vmem:[%s290 + $0x10] sm:$0xf]
      %v310 = vld [vmem:[%s290 + $0x14] sm:$0xf]
      %v311 = vld [vmem:[%s290 + $0x18] sm:$0xf]
      %v312 = vld [vmem:[%s290 + $0x1c] sm:$0xf]
      %v313 = vld [vmem:[%s290 + $0x20] sm:$0xf]
      %v314 = vld [vmem:[%s290 + $0x24] sm:$0xf]
      %v315 = vld [vmem:[%s290 + $0x28] sm:$0xf]
      %v316 = vld [vmem:[%s290 + $0x2c] sm:$0xf]
      %v317 = vld [vmem:[%s290 + $0x30] sm:$0xf]
      %v318 = vld [vmem:[%s290 + $0x34] sm:$0xf]
      %v319 = vld [vmem:[%s290 + $0x38] sm:$0xf]
      %v320 = vld [vmem:[%s290 + $0x3c] sm:$0xf]
      %v321 = vld [vmem:[%s290 + $0x40] sm:$0xf]
      %v322 = vld [vmem:[%s290 + $0x44] sm:$0xf]
      %v323 = vld [vmem:[%s290 + $0x48] sm:$0xf]
      %v324 = vld [vmem:[%s290 + $0x4c] sm:$0xf]
      %v325 = vld [vmem:[%s290 + $0x50] sm:$0xf]
      %v326 = vld [vmem:[%s290 + $0x54] sm:$0xf]
      %v327 = vld [vmem:[%s290 + $0x58] sm:$0xf]
      %v328 = vld [vmem:[%s290 + $0x5c] sm:$0xf]
      %v329 = vld [vmem:[%s290 + $0x60] sm:$0xf]
      %v330 = vld [vmem:[%s290 + $0x64] sm:$0xf]
      %v331 = vld [vmem:[%s290 + $0x68] sm:$0xf]
      %v332 = vld [vmem:[%s290 + $0x6c] sm:$0xf]
      %v333 = vld [vmem:[%s290 + $0x70] sm:$0xf]
      %v334 = vld [vmem:[%s290 + $0x74] sm:$0xf]
      %v335 = vld [vmem:[%s290 + $0x78] sm:$0xf]
      %v336 = vld [vmem:[%s290 + $0x7c] sm:$0xf]
      %v337 = vld [vmem:[%s290 + $0x80] sm:$0xf]
      %v338 = vld [vmem:[%s290 + $0x84] sm:$0xf]
      %v339 = vld [vmem:[%s290 + $0x88] sm:$0xf]
      %v340 = vld [vmem:[%s290 + $0x8c] sm:$0xf]
      %v341 = vld [vmem:[%s290 + $0x90] sm:$0xf]
      %v342 = vld [vmem:[%s290 + $0x94] sm:$0xf]
      %v343 = vld [vmem:[%s290 + $0x98] sm:$0xf]
      %v344 = vld [vmem:[%s290 + $0x9c] sm:$0xf]
      %v345 = vld [vmem:[%s290 + $0xa0] sm:$0xf]
      %v346 = vld [vmem:[%s290 + $0xa4] sm:$0xf]
      %v347 = vld [vmem:[%s290 + $0xa8] sm:$0xf]
      %v348 = vld [vmem:[%s290 + $0xac] sm:$0xf]
      %v349 = vld [vmem:[%s290 + $0xb0] sm:$0xf]
      %v350 = vld [vmem:[%s290 + $0xb4] sm:$0xf]
      %v351 = vld [vmem:[%s290 + $0xb8] sm:$0xf]
      %v352 = vld [vmem:[%s290 + $0xbc] sm:$0xf]
      %v353 = vld [vmem:[%s290 + $0xc0] sm:$0xf]
      %v354 = vld [vmem:[%s290 + $0xc4] sm:$0xf]
      %v355 = vld [vmem:[%s290 + $0xc8] sm:$0xf]
      %v356 = vld [vmem:[%s290 + $0xcc] sm:$0xf]
      %v357 = vld [vmem:[%s290 + $0xd0] sm:$0xf]
      %v358 = vld [vmem:[%s290 + $0xd4] sm:$0xf]
      %v359 = vld [vmem:[%s290 + $0xd8] sm:$0xf]
      %v360 = vld [vmem:[%s290 + $0xdc] sm:$0xf]
      %v361 = vld [vmem:[%s290 + $0xe0] sm:$0xf]
      %v362 = vld [vmem:[%s290 + $0xe4] sm:$0xf]
      %v363 = vld [vmem:[%s290 + $0xe8] sm:$0xf]
      %v364 = vld [vmem:[%s290 + $0xec] sm:$0xf]
      %v365 = vld [vmem:[%s290 + $0xf0] sm:$0xf]
      %v366 = vld [vmem:[%s290 + $0xf4] sm:$0xf]
      %v367 = vld [vmem:[%s290 + $0xf8] sm:$0xf]
      %v368 = vld [vmem:[%s290 + $0xfc] sm:$0xf]
      %v369 = vld [vmem:[%s296] sm:$0xf]
      %v370 = vld [vmem:[%s296 + $0x4] sm:$0xf]
      %v371 = vld [vmem:[%s296 + $0x8] sm:$0xf]
      %v372 = vld [vmem:[%s296 + $0xc] sm:$0xf]
      %v373 = vld [vmem:[%s296 + $0x10] sm:$0xf]
      %v374 = vld [vmem:[%s296 + $0x14] sm:$0xf]
      %v375 = vld [vmem:[%s296 + $0x18] sm:$0xf]
      %v376 = vld [vmem:[%s296 + $0x1c] sm:$0xf]
      %v377 = vld [vmem:[%s296 + $0x20] sm:$0xf]
      %v378 = vld [vmem:[%s296 + $0x24] sm:$0xf]
      %v379 = vld [vmem:[%s296 + $0x28] sm:$0xf]
      %v380 = vld [vmem:[%s296 + $0x2c] sm:$0xf]
      %v381 = vld [vmem:[%s296 + $0x30] sm:$0xf]
      %v382 = vld [vmem:[%s296 + $0x34] sm:$0xf]
      %v383 = vld [vmem:[%s296 + $0x38] sm:$0xf]
      %v384 = vld [vmem:[%s296 + $0x3c] sm:$0xf]
      %v385 = vld [vmem:[%s296 + $0x40] sm:$0xf]
      %v386 = vld [vmem:[%s296 + $0x44] sm:$0xf]
      %v387 = vld [vmem:[%s296 + $0x48] sm:$0xf]
      %v388 = vld [vmem:[%s296 + $0x4c] sm:$0xf]
      %v389 = vld [vmem:[%s296 + $0x50] sm:$0xf]
      %v390 = vld [vmem:[%s296 + $0x54] sm:$0xf]
      %v391 = vld [vmem:[%s296 + $0x58] sm:$0xf]
      %v392 = vld [vmem:[%s296 + $0x5c] sm:$0xf]
      %v393 = vld [vmem:[%s296 + $0x60] sm:$0xf]
      %v394 = vld [vmem:[%s296 + $0x64] sm:$0xf]
      %v395 = vld [vmem:[%s296 + $0x68] sm:$0xf]
      %v396 = vld [vmem:[%s296 + $0x6c] sm:$0xf]
      %v397 = vld [vmem:[%s296 + $0x70] sm:$0xf]
      %v398 = vld [vmem:[%s296 + $0x74] sm:$0xf]
      %v399 = vld [vmem:[%s296 + $0x78] sm:$0xf]
      %v400 = vld [vmem:[%s296 + $0x7c] sm:$0xf]
      %v401 = vld [vmem:[%s296 + $0x80] sm:$0xf]
      %v402 = vld [vmem:[%s296 + $0x84] sm:$0xf]
      %v403 = vld [vmem:[%s296 + $0x88] sm:$0xf]
      %v404 = vld [vmem:[%s296 + $0x8c] sm:$0xf]
      %v405 = vld [vmem:[%s296 + $0x90] sm:$0xf]
      %v406 = vld [vmem:[%s296 + $0x94] sm:$0xf]
      %v407 = vld [vmem:[%s296 + $0x98] sm:$0xf]
      %v408 = vld [vmem:[%s296 + $0x9c] sm:$0xf]
      %v409 = vld [vmem:[%s296 + $0xa0] sm:$0xf]
      %v410 = vld [vmem:[%s296 + $0xa4] sm:$0xf]
      %v411 = vld [vmem:[%s296 + $0xa8] sm:$0xf]
      %v412 = vld [vmem:[%s296 + $0xac] sm:$0xf]
      %v413 = vld [vmem:[%s296 + $0xb0] sm:$0xf]
      %v414 = vld [vmem:[%s296 + $0xb4] sm:$0xf]
      %v415 = vld [vmem:[%s296 + $0xb8] sm:$0xf]
      %v416 = vld [vmem:[%s296 + $0xbc] sm:$0xf]
      %v417 = vld [vmem:[%s296 + $0xc0] sm:$0xf]
      %v418 = vld [vmem:[%s296 + $0xc4] sm:$0xf]
      %v419 = vld [vmem:[%s296 + $0xc8] sm:$0xf]
      %v420 = vld [vmem:[%s296 + $0xcc] sm:$0xf]
      %v421 = vld [vmem:[%s296 + $0xd0] sm:$0xf]
      %v422 = vld [vmem:[%s296 + $0xd4] sm:$0xf]
      %v423 = vld [vmem:[%s296 + $0xd8] sm:$0xf]
      %v424 = vld [vmem:[%s296 + $0xdc] sm:$0xf]
      %v425 = vld [vmem:[%s296 + $0xe0] sm:$0xf]
      %v426 = vld [vmem:[%s296 + $0xe4] sm:$0xf]
      %v427 = vld [vmem:[%s296 + $0xe8] sm:$0xf]
      %v428 = vld [vmem:[%s296 + $0xec] sm:$0xf]
      %v429 = vld [vmem:[%s296 + $0xf0] sm:$0xf]
      %v430 = vld [vmem:[%s296 + $0xf4] sm:$0xf]
      %v431 = vld [vmem:[%s296 + $0xf8] sm:$0xf]
      %v432 = vld [vmem:[%s296 + $0xfc] sm:$0xf]
      %v433 = vld [vmem:[%s2] sm:$0xf]
      %v434 = vld [vmem:[%s2 + $0x4] sm:$0xf]
      %v435 = vld [vmem:[%s2 + $0x8] sm:$0xf]
      %v436 = vld [vmem:[%s2 + $0xc] sm:$0xf]
      %v437 = vld [vmem:[%s2 + $0x10] sm:$0xf]
      %v438 = vld [vmem:[%s2 + $0x14] sm:$0xf]
      %v439 = vld [vmem:[%s2 + $0x18] sm:$0xf]
      %v440 = vld [vmem:[%s2 + $0x1c] sm:$0xf]
      %v441 = vld [vmem:[%s3] sm:$0xf]
      %v442 = vld [vmem:[%s3 + $0x4] sm:$0xf]
      %v443 = vld [vmem:[%s3 + $0x8] sm:$0xf]
      %v444 = vld [vmem:[%s3 + $0xc] sm:$0xf]
      %v445 = vld [vmem:[%s3 + $0x10] sm:$0xf]
      %v446 = vld [vmem:[%s3 + $0x14] sm:$0xf]
      %v447 = vld [vmem:[%s3 + $0x18] sm:$0xf]
      %v448 = vld [vmem:[%s3 + $0x1c] sm:$0xf]
      %v513 = vunpack.c.l.b16 %v369
      %v514 = vunpack.c.l.b16 %v370
      %v515 = vunpack.c.l.b16 %v371
      %v516 = vunpack.c.l.b16 %v372
      %v517 = vunpack.c.l.b16 %v373
      %v518 = vunpack.c.l.b16 %v374
      %v519 = vunpack.c.l.b16 %v375
      %v520 = vunpack.c.l.b16 %v376
      %v521 = vunpack.c.l.b16 %v377
      %v522 = vunpack.c.l.b16 %v378
      %v523 = vunpack.c.l.b16 %v379
      %v524 = vunpack.c.l.b16 %v380
      %v525 = vunpack.c.l.b16 %v381
      %v526 = vunpack.c.l.b16 %v382
      %v527 = vunpack.c.l.b16 %v383
      %v528 = vunpack.c.l.b16 %v384
      %v529 = vunpack.c.l.b16 %v385
      %v530 = vunpack.c.l.b16 %v386
      %v531 = vunpack.c.l.b16 %v387
      %v532 = vunpack.c.l.b16 %v388
      %v533 = vunpack.c.l.b16 %v389
      %v534 = vunpack.c.l.b16 %v390
      %v535 = vunpack.c.l.b16 %v391
      %v536 = vunpack.c.l.b16 %v392
      %v537 = vunpack.c.l.b16 %v393
      %v538 = vunpack.c.l.b16 %v394
      %v539 = vunpack.c.l.b16 %v395
      %v540 = vunpack.c.l.b16 %v396
      %v541 = vunpack.c.l.b16 %v397
      %v542 = vunpack.c.l.b16 %v398
      %v543 = vunpack.c.l.b16 %v399
      %v544 = vunpack.c.l.b16 %v400
      %v545 = vunpack.c.l.b16 %v401
      %v546 = vunpack.c.l.b16 %v402
      %v547 = vunpack.c.l.b16 %v403
      %v548 = vunpack.c.l.b16 %v404
      %v549 = vunpack.c.l.b16 %v405
      %v550 = vunpack.c.l.b16 %v406
      %v551 = vunpack.c.l.b16 %v407
      %v552 = vunpack.c.l.b16 %v408
      %v553 = vunpack.c.l.b16 %v409
      %v554 = vunpack.c.l.b16 %v410
      %v555 = vunpack.c.l.b16 %v411
      %v556 = vunpack.c.l.b16 %v412
      %v557 = vunpack.c.l.b16 %v413
      %v558 = vunpack.c.l.b16 %v414
      %v559 = vunpack.c.l.b16 %v415
      %v560 = vunpack.c.l.b16 %v416
      %v561 = vunpack.c.l.b16 %v417
      %v562 = vunpack.c.l.b16 %v418
      %v563 = vunpack.c.l.b16 %v419
      %v564 = vunpack.c.l.b16 %v420
      %v565 = vunpack.c.l.b16 %v421
      %v566 = vunpack.c.l.b16 %v422
      %v567 = vunpack.c.l.b16 %v423
      %v568 = vunpack.c.l.b16 %v424
      %v569 = vunpack.c.l.b16 %v425
      %v570 = vunpack.c.l.b16 %v426
      %v571 = vunpack.c.l.b16 %v427
      %v572 = vunpack.c.l.b16 %v428
      %v573 = vunpack.c.l.b16 %v429
      %v574 = vunpack.c.l.b16 %v430
      %v575 = vunpack.c.l.b16 %v431
      %v576 = vunpack.c.l.b16 %v432
      %v577 = vpack.c.b16 %v514, %v513
      %v578 = vpack.c.b16 %v516, %v515
      %v579 = vpack.c.b16 %v518, %v517
      %v580 = vpack.c.b16 %v520, %v519
      %v581 = vpack.c.b16 %v522, %v521
      %v582 = vpack.c.b16 %v524, %v523
      %v583 = vpack.c.b16 %v526, %v525
      %v584 = vpack.c.b16 %v528, %v527
      %v585 = vpack.c.b16 %v530, %v529
      %v586 = vpack.c.b16 %v532, %v531
      %v587 = vpack.c.b16 %v534, %v533
      %v588 = vpack.c.b16 %v536, %v535
      %v589 = vpack.c.b16 %v538, %v537
      %v590 = vpack.c.b16 %v540, %v539
      %v591 = vpack.c.b16 %v542, %v541
      %v592 = vpack.c.b16 %v544, %v543
      %v593 = vpack.c.b16 %v546, %v545
      %v594 = vpack.c.b16 %v548, %v547
      %v595 = vpack.c.b16 %v550, %v549
      %v596 = vpack.c.b16 %v552, %v551
      %v597 = vpack.c.b16 %v554, %v553
      %v598 = vpack.c.b16 %v556, %v555
      %v599 = vpack.c.b16 %v558, %v557
      %v600 = vpack.c.b16 %v560, %v559
      %v601 = vpack.c.b16 %v562, %v561
      %v602 = vpack.c.b16 %v564, %v563
      %v603 = vpack.c.b16 %v566, %v565
      %v604 = vpack.c.b16 %v568, %v567
      %v605 = vpack.c.b16 %v570, %v569
      %v606 = vpack.c.b16 %v572, %v571
      %v607 = vpack.c.b16 %v574, %v573
      %v608 = vpack.c.b16 %v576, %v575
      %v617 = vunpack.c.l.b16 %v441
      %v618 = vunpack.c.l.b16 %v442
      %v619 = vunpack.c.l.b16 %v443
      %v620 = vunpack.c.l.b16 %v444
      %v621 = vunpack.c.l.b16 %v445
      %v622 = vunpack.c.l.b16 %v446
      %v623 = vunpack.c.l.b16 %v447
      %v624 = vunpack.c.l.b16 %v448
      %v625 = vpack.c.b16 %v618, %v617
      %v626 = vpack.c.b16 %v620, %v619
      %v627 = vpack.c.b16 %v622, %v621
      %v628 = vpack.c.b16 %v624, %v623
      %vm633 = vcmask 523264
      %v635 = vsel %vm633, %v577, 0
      %v638 = vsel %vm633, %v578, 0
      %v641 = vsel %vm633, %v579, 0
      %v644 = vsel %vm633, %v580, 0
      %v647 = vsel %vm633, %v581, 0
      %v650 = vsel %vm633, %v582, 0
      %v653 = vsel %vm633, %v583, 0
      %v656 = vsel %vm633, %v584, 0
      %v659 = vsel %vm633, %v585, 0
      %v662 = vsel %vm633, %v586, 0
      %v665 = vsel %vm633, %v587, 0
      %v668 = vsel %vm633, %v588, 0
      %v671 = vsel %vm633, %v589, 0
      %v674 = vsel %vm633, %v590, 0
      %v677 = vsel %vm633, %v591, 0
      %v680 = vsel %vm633, %v592, 0
      %v683 = vsel %vm633, %v593, 0
      %v686 = vsel %vm633, %v594, 0
      %v689 = vsel %vm633, %v595, 0
      %v692 = vsel %vm633, %v596, 0
      %v695 = vsel %vm633, %v597, 0
      %v698 = vsel %vm633, %v598, 0
      %v701 = vsel %vm633, %v599, 0
      %v704 = vsel %vm633, %v600, 0
      %v707 = vsel %vm633, %v601, 0
      %v710 = vsel %vm633, %v602, 0
      %v713 = vsel %vm633, %v603, 0
      %v716 = vsel %vm633, %v604, 0
      %v719 = vsel %vm633, %v605, 0
      %v722 = vsel %vm633, %v606, 0
      %v725 = vsel %vm633, %v607, 0
      %v728 = vsel %vm633, %v608, 0
      %730 = vmatpush.bf16.msra.mxu0 0
      %731 = vmatpush.bf16.msra.mxu0 0
      %732 = vmatpush.bf16.msra.mxu0 0
      %733 = vmatpush.bf16.msra.mxu0 0
      %734 = vmatpush.bf16.msra.mxu0 %v628
      %735 = vmatpush.bf16.msra.mxu0 %v627
      %736 = vmatpush.bf16.msra.mxu0 %v626
      %737 = vmatpush.bf16.msra.mxu0 %v625
      %738 = vmatmul.bf16.gmra.mxu0 %v635
      %v739 = vpop.f32.mrf.mxu0
      %v740 = vadd.f32 0.0, %v739
      %v741 = vpop.f32.mrf.mxu0
      %v742 = vadd.f32 0.0, %v741
      %743 = vmatmul.bf16.gmra.mxu0 %v638
      %v744 = vpop.f32.mrf.mxu0
      %v745 = vadd.f32 0.0, %v744
      %v746 = vpop.f32.mrf.mxu0
      %v747 = vadd.f32 0.0, %v746
      %748 = vmatmul.bf16.gmra.mxu0 %v641
      %v749 = vpop.f32.mrf.mxu0
      %v750 = vadd.f32 0.0, %v749
      %v751 = vpop.f32.mrf.mxu0
      %v752 = vadd.f32 0.0, %v751
      %753 = vmatmul.bf16.gmra.mxu0 %v644
      %v754 = vpop.f32.mrf.mxu0
      %v755 = vadd.f32 0.0, %v754
      %v756 = vpop.f32.mrf.mxu0
      %v757 = vadd.f32 0.0, %v756
      %758 = vmatmul.bf16.gmra.mxu0 %v647
      %v759 = vpop.f32.mrf.mxu0
      %v760 = vadd.f32 0.0, %v759
      %v761 = vpop.f32.mrf.mxu0
      %v762 = vadd.f32 0.0, %v761
      %763 = vmatmul.bf16.gmra.mxu0 %v650
      %v764 = vpop.f32.mrf.mxu0
      %v765 = vadd.f32 0.0, %v764
      %v766 = vpop.f32.mrf.mxu0
      %v767 = vadd.f32 0.0, %v766
      %768 = vmatmul.bf16.gmra.mxu0 %v653
      %v769 = vpop.f32.mrf.mxu0
      %v770 = vadd.f32 0.0, %v769
      %v771 = vpop.f32.mrf.mxu0
      %v772 = vadd.f32 0.0, %v771
      %773 = vmatmul.bf16.gmra.mxu0 %v656
      %v774 = vpop.f32.mrf.mxu0
      %v775 = vadd.f32 0.0, %v774
      %v776 = vpop.f32.mrf.mxu0
      %v777 = vadd.f32 0.0, %v776
      %778 = vmatmul.bf16.gmra.mxu0 %v659
      %v779 = vpop.f32.mrf.mxu0
      %v780 = vadd.f32 0.0, %v779
      %v781 = vpop.f32.mrf.mxu0
      %v782 = vadd.f32 0.0, %v781
      %783 = vmatmul.bf16.gmra.mxu0 %v662
      %v784 = vpop.f32.mrf.mxu0
      %v785 = vadd.f32 0.0, %v784
      %v786 = vpop.f32.mrf.mxu0
      %v787 = vadd.f32 0.0, %v786
      %788 = vmatmul.bf16.gmra.mxu0 %v665
      %v789 = vpop.f32.mrf.mxu0
      %v790 = vadd.f32 0.0, %v789
      %v791 = vpop.f32.mrf.mxu0
      %v792 = vadd.f32 0.0, %v791
      %793 = vmatmul.bf16.gmra.mxu0 %v668
      %v794 = vpop.f32.mrf.mxu0
      %v795 = vadd.f32 0.0, %v794
      %v796 = vpop.f32.mrf.mxu0
      %v797 = vadd.f32 0.0, %v796
      %798 = vmatmul.bf16.gmra.mxu0 %v671
      %v799 = vpop.f32.mrf.mxu0
      %v800 = vadd.f32 0.0, %v799
      %v801 = vpop.f32.mrf.mxu0
      %v802 = vadd.f32 0.0, %v801
      %803 = vmatmul.bf16.gmra.mxu0 %v674
      %v804 = vpop.f32.mrf.mxu0
      %v805 = vadd.f32 0.0, %v804
      %v806 = vpop.f32.mrf.mxu0
      %v807 = vadd.f32 0.0, %v806
      %808 = vmatmul.bf16.gmra.mxu0 %v677
      %v809 = vpop.f32.mrf.mxu0
      %v810 = vadd.f32 0.0, %v809
      %v811 = vpop.f32.mrf.mxu0
      %v812 = vadd.f32 0.0, %v811
      %813 = vmatmul.bf16.gmra.mxu0 %v680
      %v814 = vpop.f32.mrf.mxu0
      %v815 = vadd.f32 0.0, %v814
      %v816 = vpop.f32.mrf.mxu0
      %v817 = vadd.f32 0.0, %v816
      %818 = vmatmul.bf16.gmra.mxu0 %v683
      %v819 = vpop.f32.mrf.mxu0
      %v820 = vadd.f32 0.0, %v819
      %v821 = vpop.f32.mrf.mxu0
      %v822 = vadd.f32 0.0, %v821
      %823 = vmatmul.bf16.gmra.mxu0 %v686
      %v824 = vpop.f32.mrf.mxu0
      %v825 = vadd.f32 0.0, %v824
      %v826 = vpop.f32.mrf.mxu0
      %v827 = vadd.f32 0.0, %v826
      %828 = vmatmul.bf16.gmra.mxu0 %v689
      %v829 = vpop.f32.mrf.mxu0
      %v830 = vadd.f32 0.0, %v829
      %v831 = vpop.f32.mrf.mxu0
      %v832 = vadd.f32 0.0, %v831
      %833 = vmatmul.bf16.gmra.mxu0 %v692
      %v834 = vpop.f32.mrf.mxu0
      %v835 = vadd.f32 0.0, %v834
      %v836 = vpop.f32.mrf.mxu0
      %v837 = vadd.f32 0.0, %v836
      %838 = vmatmul.bf16.gmra.mxu0 %v695
      %v839 = vpop.f32.mrf.mxu0
      %v840 = vadd.f32 0.0, %v839
      %v841 = vpop.f32.mrf.mxu0
      %v842 = vadd.f32 0.0, %v841
      %843 = vmatmul.bf16.gmra.mxu0 %v698
      %v844 = vpop.f32.mrf.mxu0
      %v845 = vadd.f32 0.0, %v844
      %v846 = vpop.f32.mrf.mxu0
      %v847 = vadd.f32 0.0, %v846
      %848 = vmatmul.bf16.gmra.mxu0 %v701
      %v849 = vpop.f32.mrf.mxu0
      %v850 = vadd.f32 0.0, %v849
      %v851 = vpop.f32.mrf.mxu0
      %v852 = vadd.f32 0.0, %v851
      %853 = vmatmul.bf16.gmra.mxu0 %v704
      %v854 = vpop.f32.mrf.mxu0
      %v855 = vadd.f32 0.0, %v854
      %v856 = vpop.f32.mrf.mxu0
      %v857 = vadd.f32 0.0, %v856
      %858 = vmatmul.bf16.gmra.mxu0 %v707
      %v859 = vpop.f32.mrf.mxu0
      %v860 = vadd.f32 0.0, %v859
      %v861 = vpop.f32.mrf.mxu0
      %v862 = vadd.f32 0.0, %v861
      %863 = vmatmul.bf16.gmra.mxu0 %v710
      %v864 = vpop.f32.mrf.mxu0
      %v865 = vadd.f32 0.0, %v864
      %v866 = vpop.f32.mrf.mxu0
      %v867 = vadd.f32 0.0, %v866
      %868 = vmatmul.bf16.gmra.mxu0 %v713
      %v869 = vpop.f32.mrf.mxu0
      %v870 = vadd.f32 0.0, %v869
      %v871 = vpop.f32.mrf.mxu0
      %v872 = vadd.f32 0.0, %v871
      %873 = vmatmul.bf16.gmra.mxu0 %v716
      %v874 = vpop.f32.mrf.mxu0
      %v875 = vadd.f32 0.0, %v874
      %v876 = vpop.f32.mrf.mxu0
      %v877 = vadd.f32 0.0, %v876
      %878 = vmatmul.bf16.gmra.mxu0 %v719
      %v879 = vpop.f32.mrf.mxu0
      %v880 = vadd.f32 0.0, %v879
      %v881 = vpop.f32.mrf.mxu0
      %v882 = vadd.f32 0.0, %v881
      %883 = vmatmul.bf16.gmra.mxu0 %v722
      %v884 = vpop.f32.mrf.mxu0
      %v885 = vadd.f32 0.0, %v884
      %v886 = vpop.f32.mrf.mxu0
      %v887 = vadd.f32 0.0, %v886
      %888 = vmatmul.bf16.gmra.mxu0 %v725
      %v889 = vpop.f32.mrf.mxu0
      %v890 = vadd.f32 0.0, %v889
      %v891 = vpop.f32.mrf.mxu0
      %v892 = vadd.f32 0.0, %v891
      %893 = vmatmul.bf16.gmra.mxu0 %v728
      %v894 = vpop.f32.mrf.mxu0
      %v895 = vadd.f32 0.0, %v894
      %v896 = vpop.f32.mrf.mxu0
      %v897 = vadd.f32 0.0, %v896
      %898 = vdwg.mxu0
      %v963 = vunpack.c.l.b16 %v305
      %v964 = vunpack.c.l.b16 %v306
      %v965 = vunpack.c.l.b16 %v307
      %v966 = vunpack.c.l.b16 %v308
      %v967 = vunpack.c.l.b16 %v309
      %v968 = vunpack.c.l.b16 %v310
      %v969 = vunpack.c.l.b16 %v311
      %v970 = vunpack.c.l.b16 %v312
      %v971 = vunpack.c.l.b16 %v313
      %v972 = vunpack.c.l.b16 %v314
      %v973 = vunpack.c.l.b16 %v315
      %v974 = vunpack.c.l.b16 %v316
      %v975 = vunpack.c.l.b16 %v317
      %v976 = vunpack.c.l.b16 %v318
      %v977 = vunpack.c.l.b16 %v319
      %v978 = vunpack.c.l.b16 %v320
      %v979 = vunpack.c.l.b16 %v321
      %v980 = vunpack.c.l.b16 %v322
      %v981 = vunpack.c.l.b16 %v323
      %v982 = vunpack.c.l.b16 %v324
      %v983 = vunpack.c.l.b16 %v325
      %v984 = vunpack.c.l.b16 %v326
      %v985 = vunpack.c.l.b16 %v327
      %v986 = vunpack.c.l.b16 %v328
      %v987 = vunpack.c.l.b16 %v329
      %v988 = vunpack.c.l.b16 %v330
      %v989 = vunpack.c.l.b16 %v331
      %v990 = vunpack.c.l.b16 %v332
      %v991 = vunpack.c.l.b16 %v333
      %v992 = vunpack.c.l.b16 %v334
      %v993 = vunpack.c.l.b16 %v335
      %v994 = vunpack.c.l.b16 %v336
      %v995 = vunpack.c.l.b16 %v337
      %v996 = vunpack.c.l.b16 %v338
      %v997 = vunpack.c.l.b16 %v339
      %v998 = vunpack.c.l.b16 %v340
      %v999 = vunpack.c.l.b16 %v341
      %v1000 = vunpack.c.l.b16 %v342
      %v1001 = vunpack.c.l.b16 %v343
      %v1002 = vunpack.c.l.b16 %v344
      %v1003 = vunpack.c.l.b16 %v345
      %v1004 = vunpack.c.l.b16 %v346
      %v1005 = vunpack.c.l.b16 %v347
      %v1006 = vunpack.c.l.b16 %v348
      %v1007 = vunpack.c.l.b16 %v349
      %v1008 = vunpack.c.l.b16 %v350
      %v1009 = vunpack.c.l.b16 %v351
      %v1010 = vunpack.c.l.b16 %v352
      %v1011 = vunpack.c.l.b16 %v353
      %v1012 = vunpack.c.l.b16 %v354
      %v1013 = vunpack.c.l.b16 %v355
      %v1014 = vunpack.c.l.b16 %v356
      %v1015 = vunpack.c.l.b16 %v357
      %v1016 = vunpack.c.l.b16 %v358
      %v1017 = vunpack.c.l.b16 %v359
      %v1018 = vunpack.c.l.b16 %v360
      %v1019 = vunpack.c.l.b16 %v361
      %v1020 = vunpack.c.l.b16 %v362
      %v1021 = vunpack.c.l.b16 %v363
      %v1022 = vunpack.c.l.b16 %v364
      %v1023 = vunpack.c.l.b16 %v365
      %v1024 = vunpack.c.l.b16 %v366
      %v1025 = vunpack.c.l.b16 %v367
      %v1026 = vunpack.c.l.b16 %v368
      %v1027 = vpack.c.b16 %v964, %v963
      %v1028 = vpack.c.b16 %v966, %v965
      %v1029 = vpack.c.b16 %v968, %v967
      %v1030 = vpack.c.b16 %v970, %v969
      %v1031 = vpack.c.b16 %v972, %v971
      %v1032 = vpack.c.b16 %v974, %v973
      %v1033 = vpack.c.b16 %v976, %v975
      %v1034 = vpack.c.b16 %v978, %v977
      %v1035 = vpack.c.b16 %v980, %v979
      %v1036 = vpack.c.b16 %v982, %v981
      %v1037 = vpack.c.b16 %v984, %v983
      %v1038 = vpack.c.b16 %v986, %v985
      %v1039 = vpack.c.b16 %v988, %v987
      %v1040 = vpack.c.b16 %v990, %v989
      %v1041 = vpack.c.b16 %v992, %v991
      %v1042 = vpack.c.b16 %v994, %v993
      %v1043 = vpack.c.b16 %v996, %v995
      %v1044 = vpack.c.b16 %v998, %v997
      %v1045 = vpack.c.b16 %v1000, %v999
      %v1046 = vpack.c.b16 %v1002, %v1001
      %v1047 = vpack.c.b16 %v1004, %v1003
      %v1048 = vpack.c.b16 %v1006, %v1005
      %v1049 = vpack.c.b16 %v1008, %v1007
      %v1050 = vpack.c.b16 %v1010, %v1009
      %v1051 = vpack.c.b16 %v1012, %v1011
      %v1052 = vpack.c.b16 %v1014, %v1013
      %v1053 = vpack.c.b16 %v1016, %v1015
      %v1054 = vpack.c.b16 %v1018, %v1017
      %v1055 = vpack.c.b16 %v1020, %v1019
      %v1056 = vpack.c.b16 %v1022, %v1021
      %v1057 = vpack.c.b16 %v1024, %v1023
      %v1058 = vpack.c.b16 %v1026, %v1025
      %v1067 = vunpack.c.l.b16 %v433
      %v1068 = vunpack.c.l.b16 %v434
      %v1069 = vunpack.c.l.b16 %v435
      %v1070 = vunpack.c.l.b16 %v436
      %v1071 = vunpack.c.l.b16 %v437
      %v1072 = vunpack.c.l.b16 %v438
      %v1073 = vunpack.c.l.b16 %v439
      %v1074 = vunpack.c.l.b16 %v440
      %v1075 = vpack.c.b16 %v1068, %v1067
      %v1076 = vpack.c.b16 %v1070, %v1069
      %v1077 = vpack.c.b16 %v1072, %v1071
      %v1078 = vpack.c.b16 %v1074, %v1073
      %v1084 = vsel %vm633, %v1027, 0
      %v1087 = vsel %vm633, %v1028, 0
      %v1090 = vsel %vm633, %v1029, 0
      %v1093 = vsel %vm633, %v1030, 0
      %v1096 = vsel %vm633, %v1031, 0
      %v1099 = vsel %vm633, %v1032, 0
      %v1102 = vsel %vm633, %v1033, 0
      %v1105 = vsel %vm633, %v1034, 0
      %v1108 = vsel %vm633, %v1035, 0
      %v1111 = vsel %vm633, %v1036, 0
      %v1114 = vsel %vm633, %v1037, 0
      %v1117 = vsel %vm633, %v1038, 0
      %v1120 = vsel %vm633, %v1039, 0
      %v1123 = vsel %vm633, %v1040, 0
      %v1126 = vsel %vm633, %v1041, 0
      %v1129 = vsel %vm633, %v1042, 0
      %v1132 = vsel %vm633, %v1043, 0
      %v1135 = vsel %vm633, %v1044, 0
      %v1138 = vsel %vm633, %v1045, 0
      %v1141 = vsel %vm633, %v1046, 0
      %v1144 = vsel %vm633, %v1047, 0
      %v1147 = vsel %vm633, %v1048, 0
      %v1150 = vsel %vm633, %v1049, 0
      %v1153 = vsel %vm633, %v1050, 0
      %v1156 = vsel %vm633, %v1051, 0
      %v1159 = vsel %vm633, %v1052, 0
      %v1162 = vsel %vm633, %v1053, 0
      %v1165 = vsel %vm633, %v1054, 0
      %v1168 = vsel %vm633, %v1055, 0
      %v1171 = vsel %vm633, %v1056, 0
      %v1174 = vsel %vm633, %v1057, 0
      %v1177 = vsel %vm633, %v1058, 0
      %1179 = vmatpush.bf16.msra.mxu0 0
      %1180 = vmatpush.bf16.msra.mxu0 0
      %1181 = vmatpush.bf16.msra.mxu0 0
      %1182 = vmatpush.bf16.msra.mxu0 0
      %1183 = vmatpush.bf16.msra.mxu0 %v1078
      %1184 = vmatpush.bf16.msra.mxu0 %v1077
      %1185 = vmatpush.bf16.msra.mxu0 %v1076
      %1186 = vmatpush.bf16.msra.mxu0 %v1075
      %1187 = vmatmul.bf16.gmra.mxu0 %v1084
      %v1188 = vpop.f32.mrf.mxu0
      %v1189 = vadd.f32 %v740, %v1188
      %v1190 = vpop.f32.mrf.mxu0
      %v1191 = vadd.f32 %v742, %v1190
      %1192 = vmatmul.bf16.gmra.mxu0 %v1087
      %v1193 = vpop.f32.mrf.mxu0
      %v1194 = vadd.f32 %v745, %v1193
      %v1195 = vpop.f32.mrf.mxu0
      %v1196 = vadd.f32 %v747, %v1195
      %1197 = vmatmul.bf16.gmra.mxu0 %v1090
      %v1198 = vpop.f32.mrf.mxu0
      %v1199 = vadd.f32 %v750, %v1198
      %v1200 = vpop.f32.mrf.mxu0
      %v1201 = vadd.f32 %v752, %v1200
      %1202 = vmatmul.bf16.gmra.mxu0 %v1093
      %v1203 = vpop.f32.mrf.mxu0
      %v1204 = vadd.f32 %v755, %v1203
      %v1205 = vpop.f32.mrf.mxu0
      %v1206 = vadd.f32 %v757, %v1205
      %1207 = vmatmul.bf16.gmra.mxu0 %v1096
      %v1208 = vpop.f32.mrf.mxu0
      %v1209 = vadd.f32 %v760, %v1208
      %v1210 = vpop.f32.mrf.mxu0
      %v1211 = vadd.f32 %v762, %v1210
      %1212 = vmatmul.bf16.gmra.mxu0 %v1099
      %v1213 = vpop.f32.mrf.mxu0
      %v1214 = vadd.f32 %v765, %v1213
      %v1215 = vpop.f32.mrf.mxu0
      %v1216 = vadd.f32 %v767, %v1215
      %1217 = vmatmul.bf16.gmra.mxu0 %v1102
      %v1218 = vpop.f32.mrf.mxu0
      %v1219 = vadd.f32 %v770, %v1218
      %v1220 = vpop.f32.mrf.mxu0
      %v1221 = vadd.f32 %v772, %v1220
      %1222 = vmatmul.bf16.gmra.mxu0 %v1105
      %v1223 = vpop.f32.mrf.mxu0
      %v1224 = vadd.f32 %v775, %v1223
      %v1225 = vpop.f32.mrf.mxu0
      %v1226 = vadd.f32 %v777, %v1225
      %1227 = vmatmul.bf16.gmra.mxu0 %v1108
      %v1228 = vpop.f32.mrf.mxu0
      %v1229 = vadd.f32 %v780, %v1228
      %v1230 = vpop.f32.mrf.mxu0
      %v1231 = vadd.f32 %v782, %v1230
      %1232 = vmatmul.bf16.gmra.mxu0 %v1111
      %v1233 = vpop.f32.mrf.mxu0
      %v1234 = vadd.f32 %v785, %v1233
      %v1235 = vpop.f32.mrf.mxu0
      %v1236 = vadd.f32 %v787, %v1235
      %1237 = vmatmul.bf16.gmra.mxu0 %v1114
      %v1238 = vpop.f32.mrf.mxu0
      %v1239 = vadd.f32 %v790, %v1238
      %v1240 = vpop.f32.mrf.mxu0
      %v1241 = vadd.f32 %v792, %v1240
      %1242 = vmatmul.bf16.gmra.mxu0 %v1117
      %v1243 = vpop.f32.mrf.mxu0
      %v1244 = vadd.f32 %v795, %v1243
      %v1245 = vpop.f32.mrf.mxu0
      %v1246 = vadd.f32 %v797, %v1245
      %1247 = vmatmul.bf16.gmra.mxu0 %v1120
      %v1248 = vpop.f32.mrf.mxu0
      %v1249 = vadd.f32 %v800, %v1248
      %v1250 = vpop.f32.mrf.mxu0
      %v1251 = vadd.f32 %v802, %v1250
      %1252 = vmatmul.bf16.gmra.mxu0 %v1123
      %v1253 = vpop.f32.mrf.mxu0
      %v1254 = vadd.f32 %v805, %v1253
      %v1255 = vpop.f32.mrf.mxu0
      %v1256 = vadd.f32 %v807, %v1255
      %1257 = vmatmul.bf16.gmra.mxu0 %v1126
      %v1258 = vpop.f32.mrf.mxu0
      %v1259 = vadd.f32 %v810, %v1258
      %v1260 = vpop.f32.mrf.mxu0
      %v1261 = vadd.f32 %v812, %v1260
      %1262 = vmatmul.bf16.gmra.mxu0 %v1129
      %v1263 = vpop.f32.mrf.mxu0
      %v1264 = vadd.f32 %v815, %v1263
      %v1265 = vpop.f32.mrf.mxu0
      %v1266 = vadd.f32 %v817, %v1265
      %1267 = vmatmul.bf16.gmra.mxu0 %v1132
      %v1268 = vpop.f32.mrf.mxu0
      %v1269 = vadd.f32 %v820, %v1268
      %v1270 = vpop.f32.mrf.mxu0
      %v1271 = vadd.f32 %v822, %v1270
      %1272 = vmatmul.bf16.gmra.mxu0 %v1135
      %v1273 = vpop.f32.mrf.mxu0
      %v1274 = vadd.f32 %v825, %v1273
      %v1275 = vpop.f32.mrf.mxu0
      %v1276 = vadd.f32 %v827, %v1275
      %1277 = vmatmul.bf16.gmra.mxu0 %v1138
      %v1278 = vpop.f32.mrf.mxu0
      %v1279 = vadd.f32 %v830, %v1278
      %v1280 = vpop.f32.mrf.mxu0
      %v1281 = vadd.f32 %v832, %v1280
      %1282 = vmatmul.bf16.gmra.mxu0 %v1141
      %v1283 = vpop.f32.mrf.mxu0
      %v1284 = vadd.f32 %v835, %v1283
      %v1285 = vpop.f32.mrf.mxu0
      %v1286 = vadd.f32 %v837, %v1285
      %1287 = vmatmul.bf16.gmra.mxu0 %v1144
      %v1288 = vpop.f32.mrf.mxu0
      %v1289 = vadd.f32 %v840, %v1288
      %v1290 = vpop.f32.mrf.mxu0
      %v1291 = vadd.f32 %v842, %v1290
      %1292 = vmatmul.bf16.gmra.mxu0 %v1147
      %v1293 = vpop.f32.mrf.mxu0
      %v1294 = vadd.f32 %v845, %v1293
      %v1295 = vpop.f32.mrf.mxu0
      %v1296 = vadd.f32 %v847, %v1295
      %1297 = vmatmul.bf16.gmra.mxu0 %v1150
      %v1298 = vpop.f32.mrf.mxu0
      %v1299 = vadd.f32 %v850, %v1298
      %v1300 = vpop.f32.mrf.mxu0
      %v1301 = vadd.f32 %v852, %v1300
      %1302 = vmatmul.bf16.gmra.mxu0 %v1153
      %v1303 = vpop.f32.mrf.mxu0
      %v1304 = vadd.f32 %v855, %v1303
      %v1305 = vpop.f32.mrf.mxu0
      %v1306 = vadd.f32 %v857, %v1305
      %1307 = vmatmul.bf16.gmra.mxu0 %v1156
      %v1308 = vpop.f32.mrf.mxu0
      %v1309 = vadd.f32 %v860, %v1308
      %v1310 = vpop.f32.mrf.mxu0
      %v1311 = vadd.f32 %v862, %v1310
      %1312 = vmatmul.bf16.gmra.mxu0 %v1159
      %v1313 = vpop.f32.mrf.mxu0
      %v1314 = vadd.f32 %v865, %v1313
      %v1315 = vpop.f32.mrf.mxu0
      %v1316 = vadd.f32 %v867, %v1315
      %1317 = vmatmul.bf16.gmra.mxu0 %v1162
      %v1318 = vpop.f32.mrf.mxu0
      %v1319 = vadd.f32 %v870, %v1318
      %v1320 = vpop.f32.mrf.mxu0
      %v1321 = vadd.f32 %v872, %v1320
      %1322 = vmatmul.bf16.gmra.mxu0 %v1165
      %v1323 = vpop.f32.mrf.mxu0
      %v1324 = vadd.f32 %v875, %v1323
      %v1325 = vpop.f32.mrf.mxu0
      %v1326 = vadd.f32 %v877, %v1325
      %1327 = vmatmul.bf16.gmra.mxu0 %v1168
      %v1328 = vpop.f32.mrf.mxu0
      %v1329 = vadd.f32 %v880, %v1328
      %v1330 = vpop.f32.mrf.mxu0
      %v1331 = vadd.f32 %v882, %v1330
      %1332 = vmatmul.bf16.gmra.mxu0 %v1171
      %v1333 = vpop.f32.mrf.mxu0
      %v1334 = vadd.f32 %v885, %v1333
      %v1335 = vpop.f32.mrf.mxu0
      %v1336 = vadd.f32 %v887, %v1335
      %1337 = vmatmul.bf16.gmra.mxu0 %v1174
      %v1338 = vpop.f32.mrf.mxu0
      %v1339 = vadd.f32 %v890, %v1338
      %v1340 = vpop.f32.mrf.mxu0
      %v1341 = vadd.f32 %v892, %v1340
      %1342 = vmatmul.bf16.gmra.mxu0 %v1177
      %v1343 = vpop.f32.mrf.mxu0
      %v1344 = vadd.f32 %v895, %v1343
      %v1345 = vpop.f32.mrf.mxu0
      %v1346 = vadd.f32 %v897, %v1345
      %1347 = vdwg.mxu0
      %v1348 = vld [vmem:[%s4] sm:$0x1]
      %v1350 = vperm.slane %v1348, 0
      %v1352 = vadd.f32 %v1189, %v1350
      %v1353 = vadd.f32 %v1191, %v1350
      %v1354 = vadd.f32 %v1194, %v1350
      %v1355 = vadd.f32 %v1196, %v1350
      %v1356 = vadd.f32 %v1199, %v1350
      %v1357 = vadd.f32 %v1201, %v1350
      %v1358 = vadd.f32 %v1204, %v1350
      %v1359 = vadd.f32 %v1206, %v1350
      %v1360 = vadd.f32 %v1209, %v1350
      %v1361 = vadd.f32 %v1211, %v1350
      %v1362 = vadd.f32 %v1214, %v1350
      %v1363 = vadd.f32 %v1216, %v1350
      %v1364 = vadd.f32 %v1219, %v1350
      %v1365 = vadd.f32 %v1221, %v1350
      %v1366 = vadd.f32 %v1224, %v1350
      %v1367 = vadd.f32 %v1226, %v1350
      %v1368 = vadd.f32 %v1229, %v1350
      %v1369 = vadd.f32 %v1231, %v1350
      %v1370 = vadd.f32 %v1234, %v1350
      %v1371 = vadd.f32 %v1236, %v1350
      %v1372 = vadd.f32 %v1239, %v1350
      %v1373 = vadd.f32 %v1241, %v1350
      %v1374 = vadd.f32 %v1244, %v1350
      %v1375 = vadd.f32 %v1246, %v1350
      %v1376 = vadd.f32 %v1249, %v1350
      %v1377 = vadd.f32 %v1251, %v1350
      %v1378 = vadd.f32 %v1254, %v1350
      %v1379 = vadd.f32 %v1256, %v1350
      %v1380 = vadd.f32 %v1259, %v1350
      %v1381 = vadd.f32 %v1261, %v1350
      %v1382 = vadd.f32 %v1264, %v1350
      %v1383 = vadd.f32 %v1266, %v1350
      %v1384 = vadd.f32 %v1269, %v1350
      %v1385 = vadd.f32 %v1271, %v1350
      %v1386 = vadd.f32 %v1274, %v1350
      %v1387 = vadd.f32 %v1276, %v1350
      %v1388 = vadd.f32 %v1279, %v1350
      %v1389 = vadd.f32 %v1281, %v1350
      %v1390 = vadd.f32 %v1284, %v1350
      %v1391 = vadd.f32 %v1286, %v1350
      %v1392 = vadd.f32 %v1289, %v1350
      %v1393 = vadd.f32 %v1291, %v1350
      %v1394 = vadd.f32 %v1294, %v1350
      %v1395 = vadd.f32 %v1296, %v1350
      %v1396 = vadd.f32 %v1299, %v1350
      %v1397 = vadd.f32 %v1301, %v1350
      %v1398 = vadd.f32 %v1304, %v1350
      %v1399 = vadd.f32 %v1306, %v1350
      %v1400 = vadd.f32 %v1309, %v1350
      %v1401 = vadd.f32 %v1311, %v1350
      %v1402 = vadd.f32 %v1314, %v1350
      %v1403 = vadd.f32 %v1316, %v1350
      %v1404 = vadd.f32 %v1319, %v1350
      %v1405 = vadd.f32 %v1321, %v1350
      %v1406 = vadd.f32 %v1324, %v1350
      %v1407 = vadd.f32 %v1326, %v1350
      %v1408 = vadd.f32 %v1329, %v1350
      %v1409 = vadd.f32 %v1331, %v1350
      %v1410 = vadd.f32 %v1334, %v1350
      %v1411 = vadd.f32 %v1336, %v1350
      %v1412 = vadd.f32 %v1339, %v1350
      %v1413 = vadd.f32 %v1341, %v1350
      %v1414 = vadd.f32 %v1344, %v1350
      %v1415 = vadd.f32 %v1346, %v1350
      %v1416 = vmax.f32 %v1352, 0.0
      %v1417 = vmax.f32 %v1353, 0.0
      %v1418 = vmax.f32 %v1354, 0.0
      %v1419 = vmax.f32 %v1355, 0.0
      %v1420 = vmax.f32 %v1356, 0.0
      %v1421 = vmax.f32 %v1357, 0.0
      %v1422 = vmax.f32 %v1358, 0.0
      %v1423 = vmax.f32 %v1359, 0.0
      %v1424 = vmax.f32 %v1360, 0.0
      %v1425 = vmax.f32 %v1361, 0.0
      %v1426 = vmax.f32 %v1362, 0.0
      %v1427 = vmax.f32 %v1363, 0.0
      %v1428 = vmax.f32 %v1364, 0.0
      %v1429 = vmax.f32 %v1365, 0.0
      %v1430 = vmax.f32 %v1366, 0.0
      %v1431 = vmax.f32 %v1367, 0.0
      %v1432 = vmax.f32 %v1368, 0.0
      %v1433 = vmax.f32 %v1369, 0.0
      %v1434 = vmax.f32 %v1370, 0.0
      %v1435 = vmax.f32 %v1371, 0.0
      %v1436 = vmax.f32 %v1372, 0.0
      %v1437 = vmax.f32 %v1373, 0.0
      %v1438 = vmax.f32 %v1374, 0.0
      %v1439 = vmax.f32 %v1375, 0.0
      %v1440 = vmax.f32 %v1376, 0.0
      %v1441 = vmax.f32 %v1377, 0.0
      %v1442 = vmax.f32 %v1378, 0.0
      %v1443 = vmax.f32 %v1379, 0.0
      %v1444 = vmax.f32 %v1380, 0.0
      %v1445 = vmax.f32 %v1381, 0.0
      %v1446 = vmax.f32 %v1382, 0.0
      %v1447 = vmax.f32 %v1383, 0.0
      %v1448 = vmax.f32 %v1384, 0.0
      %v1449 = vmax.f32 %v1385, 0.0
      %v1450 = vmax.f32 %v1386, 0.0
      %v1451 = vmax.f32 %v1387, 0.0
      %v1452 = vmax.f32 %v1388, 0.0
      %v1453 = vmax.f32 %v1389, 0.0
      %v1454 = vmax.f32 %v1390, 0.0
      %v1455 = vmax.f32 %v1391, 0.0
      %v1456 = vmax.f32 %v1392, 0.0
      %v1457 = vmax.f32 %v1393, 0.0
      %v1458 = vmax.f32 %v1394, 0.0
      %v1459 = vmax.f32 %v1395, 0.0
      %v1460 = vmax.f32 %v1396, 0.0
      %v1461 = vmax.f32 %v1397, 0.0
      %v1462 = vmax.f32 %v1398, 0.0
      %v1463 = vmax.f32 %v1399, 0.0
      %v1464 = vmax.f32 %v1400, 0.0
      %v1465 = vmax.f32 %v1401, 0.0
      %v1466 = vmax.f32 %v1402, 0.0
      %v1467 = vmax.f32 %v1403, 0.0
      %v1468 = vmax.f32 %v1404, 0.0
      %v1469 = vmax.f32 %v1405, 0.0
      %v1470 = vmax.f32 %v1406, 0.0
      %v1471 = vmax.f32 %v1407, 0.0
      %v1472 = vmax.f32 %v1408, 0.0
      %v1473 = vmax.f32 %v1409, 0.0
      %v1474 = vmax.f32 %v1410, 0.0
      %v1475 = vmax.f32 %v1411, 0.0
      %v1476 = vmax.f32 %v1412, 0.0
      %v1477 = vmax.f32 %v1413, 0.0
      %v1478 = vmax.f32 %v1414, 0.0
      %v1479 = vmax.f32 %v1415, 0.0
      %v1480 = vpack.c.bf16 %v1417, %v1416
      %v1481 = vpack.c.bf16 %v1419, %v1418
      %v1482 = vpack.c.bf16 %v1421, %v1420
      %v1483 = vpack.c.bf16 %v1423, %v1422
      %v1484 = vpack.c.bf16 %v1425, %v1424
      %v1485 = vpack.c.bf16 %v1427, %v1426
      %v1486 = vpack.c.bf16 %v1429, %v1428
      %v1487 = vpack.c.bf16 %v1431, %v1430
      %v1488 = vpack.c.bf16 %v1433, %v1432
      %v1489 = vpack.c.bf16 %v1435, %v1434
      %v1490 = vpack.c.bf16 %v1437, %v1436
      %v1491 = vpack.c.bf16 %v1439, %v1438
      %v1492 = vpack.c.bf16 %v1441, %v1440
      %v1493 = vpack.c.bf16 %v1443, %v1442
      %v1494 = vpack.c.bf16 %v1445, %v1444
      %v1495 = vpack.c.bf16 %v1447, %v1446
      %v1496 = vpack.c.bf16 %v1449, %v1448
      %v1497 = vpack.c.bf16 %v1451, %v1450
      %v1498 = vpack.c.bf16 %v1453, %v1452
      %v1499 = vpack.c.bf16 %v1455, %v1454
      %v1500 = vpack.c.bf16 %v1457, %v1456
      %v1501 = vpack.c.bf16 %v1459, %v1458
      %v1502 = vpack.c.bf16 %v1461, %v1460
      %v1503 = vpack.c.bf16 %v1463, %v1462
      %v1504 = vpack.c.bf16 %v1465, %v1464
      %v1505 = vpack.c.bf16 %v1467, %v1466
      %v1506 = vpack.c.bf16 %v1469, %v1468
      %v1507 = vpack.c.bf16 %v1471, %v1470
      %v1508 = vpack.c.bf16 %v1473, %v1472
      %v1509 = vpack.c.bf16 %v1475, %v1474
      %v1510 = vpack.c.bf16 %v1477, %v1476
      %v1511 = vpack.c.bf16 %v1479, %v1478
      %v1512 = vld [vmem:[%s5] sm:$0xf]
      %v1513 = vld [vmem:[%s5 + $0x4] sm:$0xf]
      %v1514 = vld [vmem:[%s5 + $0x8] sm:$0xf]
      %v1515 = vld [vmem:[%s5 + $0xc] sm:$0xf]
      %v1516 = vld [vmem:[%s5 + $0x10] sm:$0xf]
      %v1517 = vld [vmem:[%s5 + $0x14] sm:$0xf]
      %v1518 = vld [vmem:[%s5 + $0x18] sm:$0xf]
      %v1519 = vld [vmem:[%s5 + $0x1c] sm:$0xf]
      %v1520 = vld [vmem:[%s5 + $0x20] sm:$0xf]
      %v1521 = vld [vmem:[%s5 + $0x24] sm:$0xf]
      %v1522 = vld [vmem:[%s5 + $0x28] sm:$0xf]
      %v1523 = vld [vmem:[%s5 + $0x2c] sm:$0xf]
      %v1524 = vld [vmem:[%s5 + $0x30] sm:$0xf]
      %v1525 = vld [vmem:[%s5 + $0x34] sm:$0xf]
      %v1526 = vld [vmem:[%s5 + $0x38] sm:$0xf]
      %v1527 = vld [vmem:[%s5 + $0x3c] sm:$0xf]
      %v1528 = vld [vmem:[%s6] sm:$0x1]
      %v1530 = vperm.slane %v1528, 0
      %v1548 = vunpack.c.l.b16 %v1512
      %v1549 = vunpack.c.l.b16 %v1513
      %v1550 = vunpack.c.l.b16 %v1514
      %v1551 = vunpack.c.l.b16 %v1515
      %v1552 = vunpack.c.l.b16 %v1516
      %v1553 = vunpack.c.l.b16 %v1517
      %v1554 = vunpack.c.l.b16 %v1518
      %v1555 = vunpack.c.l.b16 %v1519
      %v1556 = vunpack.c.l.b16 %v1520
      %v1557 = vunpack.c.l.b16 %v1521
      %v1558 = vunpack.c.l.b16 %v1522
      %v1559 = vunpack.c.l.b16 %v1523
      %v1560 = vunpack.c.l.b16 %v1524
      %v1561 = vunpack.c.l.b16 %v1525
      %v1562 = vunpack.c.l.b16 %v1526
      %v1563 = vunpack.c.l.b16 %v1527
      %v1564 = vpack.c.b16 %v1549, %v1548
      %v1565 = vpack.c.b16 %v1551, %v1550
      %v1566 = vpack.c.b16 %v1553, %v1552
      %v1567 = vpack.c.b16 %v1555, %v1554
      %v1568 = vpack.c.b16 %v1557, %v1556
      %v1569 = vpack.c.b16 %v1559, %v1558
      %v1570 = vpack.c.b16 %v1561, %v1560
      %v1571 = vpack.c.b16 %v1563, %v1562
      %1580 = vmatpush.bf16.msra.mxu0 %v1571
      %1581 = vmatpush.bf16.msra.mxu0 %v1570
      %1582 = vmatpush.bf16.msra.mxu0 %v1569
      %1583 = vmatpush.bf16.msra.mxu0 %v1568
      %1584 = vmatpush.bf16.msra.mxu0 %v1567
      %1585 = vmatpush.bf16.msra.mxu0 %v1566
      %1586 = vmatpush.bf16.msra.mxu0 %v1565
      %1587 = vmatpush.bf16.msra.mxu0 %v1564
      %1588 = vmatmul.bf16.gmra.mxu0 %v1480
      %v1589 = vpop.f32.mrf.mxu0
      %v1590 = vadd.f32 %v1530, %v1589
      %v1591 = vpop.f32.mrf.mxu0
      %v1592 = vadd.f32 %v1530, %v1591
      %1593 = vmatmul.bf16.gmra.mxu0 %v1481
      %v1594 = vpop.f32.mrf.mxu0
      %v1595 = vadd.f32 %v1530, %v1594
      %v1596 = vpop.f32.mrf.mxu0
      %v1597 = vadd.f32 %v1530, %v1596
      %1598 = vmatmul.bf16.gmra.mxu0 %v1482
      %v1599 = vpop.f32.mrf.mxu0
      %v1600 = vadd.f32 %v1530, %v1599
      %v1601 = vpop.f32.mrf.mxu0
      %v1602 = vadd.f32 %v1530, %v1601
      %1603 = vmatmul.bf16.gmra.mxu0 %v1483
      %v1604 = vpop.f32.mrf.mxu0
      %v1605 = vadd.f32 %v1530, %v1604
      %v1606 = vpop.f32.mrf.mxu0
      %v1607 = vadd.f32 %v1530, %v1606
      %1608 = vmatmul.bf16.gmra.mxu0 %v1484
      %v1609 = vpop.f32.mrf.mxu0
      %v1610 = vadd.f32 %v1530, %v1609
      %v1611 = vpop.f32.mrf.mxu0
      %v1612 = vadd.f32 %v1530, %v1611
      %1613 = vmatmul.bf16.gmra.mxu0 %v1485
      %v1614 = vpop.f32.mrf.mxu0
      %v1615 = vadd.f32 %v1530, %v1614
      %v1616 = vpop.f32.mrf.mxu0
      %v1617 = vadd.f32 %v1530, %v1616
      %1618 = vmatmul.bf16.gmra.mxu0 %v1486
      %v1619 = vpop.f32.mrf.mxu0
      %v1620 = vadd.f32 %v1530, %v1619
      %v1621 = vpop.f32.mrf.mxu0
      %v1622 = vadd.f32 %v1530, %v1621
      %1623 = vmatmul.bf16.gmra.mxu0 %v1487
      %v1624 = vpop.f32.mrf.mxu0
      %v1625 = vadd.f32 %v1530, %v1624
      %v1626 = vpop.f32.mrf.mxu0
      %v1627 = vadd.f32 %v1530, %v1626
      %1628 = vmatmul.bf16.gmra.mxu0 %v1488
      %v1629 = vpop.f32.mrf.mxu0
      %v1630 = vadd.f32 %v1530, %v1629
      %v1631 = vpop.f32.mrf.mxu0
      %v1632 = vadd.f32 %v1530, %v1631
      %1633 = vmatmul.bf16.gmra.mxu0 %v1489
      %v1634 = vpop.f32.mrf.mxu0
      %v1635 = vadd.f32 %v1530, %v1634
      %v1636 = vpop.f32.mrf.mxu0
      %v1637 = vadd.f32 %v1530, %v1636
      %1638 = vmatmul.bf16.gmra.mxu0 %v1490
      %v1639 = vpop.f32.mrf.mxu0
      %v1640 = vadd.f32 %v1530, %v1639
      %v1641 = vpop.f32.mrf.mxu0
      %v1642 = vadd.f32 %v1530, %v1641
      %1643 = vmatmul.bf16.gmra.mxu0 %v1491
      %v1644 = vpop.f32.mrf.mxu0
      %v1645 = vadd.f32 %v1530, %v1644
      %v1646 = vpop.f32.mrf.mxu0
      %v1647 = vadd.f32 %v1530, %v1646
      %1648 = vmatmul.bf16.gmra.mxu0 %v1492
      %v1649 = vpop.f32.mrf.mxu0
      %v1650 = vadd.f32 %v1530, %v1649
      %v1651 = vpop.f32.mrf.mxu0
      %v1652 = vadd.f32 %v1530, %v1651
      %1653 = vmatmul.bf16.gmra.mxu0 %v1493
      %v1654 = vpop.f32.mrf.mxu0
      %v1655 = vadd.f32 %v1530, %v1654
      %v1656 = vpop.f32.mrf.mxu0
      %v1657 = vadd.f32 %v1530, %v1656
      %1658 = vmatmul.bf16.gmra.mxu0 %v1494
      %v1659 = vpop.f32.mrf.mxu0
      %v1660 = vadd.f32 %v1530, %v1659
      %v1661 = vpop.f32.mrf.mxu0
      %v1662 = vadd.f32 %v1530, %v1661
      %1663 = vmatmul.bf16.gmra.mxu0 %v1495
      %v1664 = vpop.f32.mrf.mxu0
      %v1665 = vadd.f32 %v1530, %v1664
      %v1666 = vpop.f32.mrf.mxu0
      %v1667 = vadd.f32 %v1530, %v1666
      %1668 = vmatmul.bf16.gmra.mxu0 %v1496
      %v1669 = vpop.f32.mrf.mxu0
      %v1670 = vadd.f32 %v1530, %v1669
      %v1671 = vpop.f32.mrf.mxu0
      %v1672 = vadd.f32 %v1530, %v1671
      %1673 = vmatmul.bf16.gmra.mxu0 %v1497
      %v1674 = vpop.f32.mrf.mxu0
      %v1675 = vadd.f32 %v1530, %v1674
      %v1676 = vpop.f32.mrf.mxu0
      %v1677 = vadd.f32 %v1530, %v1676
      %1678 = vmatmul.bf16.gmra.mxu0 %v1498
      %v1679 = vpop.f32.mrf.mxu0
      %v1680 = vadd.f32 %v1530, %v1679
      %v1681 = vpop.f32.mrf.mxu0
      %v1682 = vadd.f32 %v1530, %v1681
      %1683 = vmatmul.bf16.gmra.mxu0 %v1499
      %v1684 = vpop.f32.mrf.mxu0
      %v1685 = vadd.f32 %v1530, %v1684
      %v1686 = vpop.f32.mrf.mxu0
      %v1687 = vadd.f32 %v1530, %v1686
      %1688 = vmatmul.bf16.gmra.mxu0 %v1500
      %v1689 = vpop.f32.mrf.mxu0
      %v1690 = vadd.f32 %v1530, %v1689
      %v1691 = vpop.f32.mrf.mxu0
      %v1692 = vadd.f32 %v1530, %v1691
      %1693 = vmatmul.bf16.gmra.mxu0 %v1501
      %v1694 = vpop.f32.mrf.mxu0
      %v1695 = vadd.f32 %v1530, %v1694
      %v1696 = vpop.f32.mrf.mxu0
      %v1697 = vadd.f32 %v1530, %v1696
      %1698 = vmatmul.bf16.gmra.mxu0 %v1502
      %v1699 = vpop.f32.mrf.mxu0
      %v1700 = vadd.f32 %v1530, %v1699
      %v1701 = vpop.f32.mrf.mxu0
      %v1702 = vadd.f32 %v1530, %v1701
      %1703 = vmatmul.bf16.gmra.mxu0 %v1503
      %v1704 = vpop.f32.mrf.mxu0
      %v1705 = vadd.f32 %v1530, %v1704
      %v1706 = vpop.f32.mrf.mxu0
      %v1707 = vadd.f32 %v1530, %v1706
      %1708 = vmatmul.bf16.gmra.mxu0 %v1504
      %v1709 = vpop.f32.mrf.mxu0
      %v1710 = vadd.f32 %v1530, %v1709
      %v1711 = vpop.f32.mrf.mxu0
      %v1712 = vadd.f32 %v1530, %v1711
      %1713 = vmatmul.bf16.gmra.mxu0 %v1505
      %v1714 = vpop.f32.mrf.mxu0
      %v1715 = vadd.f32 %v1530, %v1714
      %v1716 = vpop.f32.mrf.mxu0
      %v1717 = vadd.f32 %v1530, %v1716
      %1718 = vmatmul.bf16.gmra.mxu0 %v1506
      %v1719 = vpop.f32.mrf.mxu0
      %v1720 = vadd.f32 %v1530, %v1719
      %v1721 = vpop.f32.mrf.mxu0
      %v1722 = vadd.f32 %v1530, %v1721
      %1723 = vmatmul.bf16.gmra.mxu0 %v1507
      %v1724 = vpop.f32.mrf.mxu0
      %v1725 = vadd.f32 %v1530, %v1724
      %v1726 = vpop.f32.mrf.mxu0
      %v1727 = vadd.f32 %v1530, %v1726
      %1728 = vmatmul.bf16.gmra.mxu0 %v1508
      %v1729 = vpop.f32.mrf.mxu0
      %v1730 = vadd.f32 %v1530, %v1729
      %v1731 = vpop.f32.mrf.mxu0
      %v1732 = vadd.f32 %v1530, %v1731
      %1733 = vmatmul.bf16.gmra.mxu0 %v1509
      %v1734 = vpop.f32.mrf.mxu0
      %v1735 = vadd.f32 %v1530, %v1734
      %v1736 = vpop.f32.mrf.mxu0
      %v1737 = vadd.f32 %v1530, %v1736
      %1738 = vmatmul.bf16.gmra.mxu0 %v1510
      %v1739 = vpop.f32.mrf.mxu0
      %v1740 = vadd.f32 %v1530, %v1739
      %v1741 = vpop.f32.mrf.mxu0
      %v1742 = vadd.f32 %v1530, %v1741
      %1743 = vmatmul.bf16.gmra.mxu0 %v1511
      %v1744 = vpop.f32.mrf.mxu0
      %v1745 = vadd.f32 %v1530, %v1744
      %v1746 = vpop.f32.mrf.mxu0
      %v1747 = vadd.f32 %v1530, %v1746
      %1748 = vdwg.mxu0
      %v1749 = vpack.c.bf16 %v1590, %v1590
      %v1750 = vpack.c.bf16 %v1592, %v1592
      %v1751 = vpack.c.bf16 %v1595, %v1595
      %v1752 = vpack.c.bf16 %v1597, %v1597
      %v1753 = vpack.c.bf16 %v1600, %v1600
      %v1754 = vpack.c.bf16 %v1602, %v1602
      %v1755 = vpack.c.bf16 %v1605, %v1605
      %v1756 = vpack.c.bf16 %v1607, %v1607
      %v1757 = vpack.c.bf16 %v1610, %v1610
      %v1758 = vpack.c.bf16 %v1612, %v1612
      %v1759 = vpack.c.bf16 %v1615, %v1615
      %v1760 = vpack.c.bf16 %v1617, %v1617
      %v1761 = vpack.c.bf16 %v1620, %v1620
      %v1762 = vpack.c.bf16 %v1622, %v1622
      %v1763 = vpack.c.bf16 %v1625, %v1625
      %v1764 = vpack.c.bf16 %v1627, %v1627
      %v1765 = vpack.c.bf16 %v1630, %v1630
      %v1766 = vpack.c.bf16 %v1632, %v1632
      %v1767 = vpack.c.bf16 %v1635, %v1635
      %v1768 = vpack.c.bf16 %v1637, %v1637
      %v1769 = vpack.c.bf16 %v1640, %v1640
      %v1770 = vpack.c.bf16 %v1642, %v1642
      %v1771 = vpack.c.bf16 %v1645, %v1645
      %v1772 = vpack.c.bf16 %v1647, %v1647
      %v1773 = vpack.c.bf16 %v1650, %v1650
      %v1774 = vpack.c.bf16 %v1652, %v1652
      %v1775 = vpack.c.bf16 %v1655, %v1655
      %v1776 = vpack.c.bf16 %v1657, %v1657
      %v1777 = vpack.c.bf16 %v1660, %v1660
      %v1778 = vpack.c.bf16 %v1662, %v1662
      %v1779 = vpack.c.bf16 %v1665, %v1665
      %v1780 = vpack.c.bf16 %v1667, %v1667
      %v1781 = vpack.c.bf16 %v1670, %v1670
      %v1782 = vpack.c.bf16 %v1672, %v1672
      %v1783 = vpack.c.bf16 %v1675, %v1675
      %v1784 = vpack.c.bf16 %v1677, %v1677
      %v1785 = vpack.c.bf16 %v1680, %v1680
      %v1786 = vpack.c.bf16 %v1682, %v1682
      %v1787 = vpack.c.bf16 %v1685, %v1685
      %v1788 = vpack.c.bf16 %v1687, %v1687
      %v1789 = vpack.c.bf16 %v1690, %v1690
      %v1790 = vpack.c.bf16 %v1692, %v1692
      %v1791 = vpack.c.bf16 %v1695, %v1695
      %v1792 = vpack.c.bf16 %v1697, %v1697
      %v1793 = vpack.c.bf16 %v1700, %v1700
      %v1794 = vpack.c.bf16 %v1702, %v1702
      %v1795 = vpack.c.bf16 %v1705, %v1705
      %v1796 = vpack.c.bf16 %v1707, %v1707
      %v1797 = vpack.c.bf16 %v1710, %v1710
      %v1798 = vpack.c.bf16 %v1712, %v1712
      %v1799 = vpack.c.bf16 %v1715, %v1715
      %v1800 = vpack.c.bf16 %v1717, %v1717
      %v1801 = vpack.c.bf16 %v1720, %v1720
      %v1802 = vpack.c.bf16 %v1722, %v1722
      %v1803 = vpack.c.bf16 %v1725, %v1725
      %v1804 = vpack.c.bf16 %v1727, %v1727
      %v1805 = vpack.c.bf16 %v1730, %v1730
      %v1806 = vpack.c.bf16 %v1732, %v1732
      %v1807 = vpack.c.bf16 %v1735, %v1735
      %v1808 = vpack.c.bf16 %v1737, %v1737
      %v1809 = vpack.c.bf16 %v1740, %v1740
      %v1810 = vpack.c.bf16 %v1742, %v1742
      %v1811 = vpack.c.bf16 %v1745, %v1745
      %v1812 = vpack.c.bf16 %v1747, %v1747
      %vm1813 = vcmask 257024
      %1814 = vst.msk [vmem:[%s302] sm:$0xf] %vm1813, %v1749
      %1815 = vst.msk [vmem:[%s302 + $0x4] sm:$0xf] %vm1813, %v1750
      %1816 = vst.msk [vmem:[%s302 + $0x8] sm:$0xf] %vm1813, %v1751
      %1817 = vst.msk [vmem:[%s302 + $0xc] sm:$0xf] %vm1813, %v1752
      %1818 = vst.msk [vmem:[%s302 + $0x10] sm:$0xf] %vm1813, %v1753
      %1819 = vst.msk [vmem:[%s302 + $0x14] sm:$0xf] %vm1813, %v1754
      %1820 = vst.msk [vmem:[%s302 + $0x18] sm:$0xf] %vm1813, %v1755
      %1821 = vst.msk [vmem:[%s302 + $0x1c] sm:$0xf] %vm1813, %v1756
      %1822 = vst.msk [vmem:[%s302 + $0x20] sm:$0xf] %vm1813, %v1757
      %1823 = vst.msk [vmem:[%s302 + $0x24] sm:$0xf] %vm1813, %v1758
      %1824 = vst.msk [vmem:[%s302 + $0x28] sm:$0xf] %vm1813, %v1759
      %1825 = vst.msk [vmem:[%s302 + $0x2c] sm:$0xf] %vm1813, %v1760
      %1826 = vst.msk [vmem:[%s302 + $0x30] sm:$0xf] %vm1813, %v1761
      %1827 = vst.msk [vmem:[%s302 + $0x34] sm:$0xf] %vm1813, %v1762
      %1828 = vst.msk [vmem:[%s302 + $0x38] sm:$0xf] %vm1813, %v1763
      %1829 = vst.msk [vmem:[%s302 + $0x3c] sm:$0xf] %vm1813, %v1764
      %1830 = vst.msk [vmem:[%s302 + $0x40] sm:$0xf] %vm1813, %v1765
      %1831 = vst.msk [vmem:[%s302 + $0x44] sm:$0xf] %vm1813, %v1766
      %1832 = vst.msk [vmem:[%s302 + $0x48] sm:$0xf] %vm1813, %v1767
      %1833 = vst.msk [vmem:[%s302 + $0x4c] sm:$0xf] %vm1813, %v1768
      %1834 = vst.msk [vmem:[%s302 + $0x50] sm:$0xf] %vm1813, %v1769
      %1835 = vst.msk [vmem:[%s302 + $0x54] sm:$0xf] %vm1813, %v1770
      %1836 = vst.msk [vmem:[%s302 + $0x58] sm:$0xf] %vm1813, %v1771
      %1837 = vst.msk [vmem:[%s302 + $0x5c] sm:$0xf] %vm1813, %v1772
      %1838 = vst.msk [vmem:[%s302 + $0x60] sm:$0xf] %vm1813, %v1773
      %1839 = vst.msk [vmem:[%s302 + $0x64] sm:$0xf] %vm1813, %v1774
      %1840 = vst.msk [vmem:[%s302 + $0x68] sm:$0xf] %vm1813, %v1775
      %1841 = vst.msk [vmem:[%s302 + $0x6c] sm:$0xf] %vm1813, %v1776
      %1842 = vst.msk [vmem:[%s302 + $0x70] sm:$0xf] %vm1813, %v1777
      %1843 = vst.msk [vmem:[%s302 + $0x74] sm:$0xf] %vm1813, %v1778
      %1844 = vst.msk [vmem:[%s302 + $0x78] sm:$0xf] %vm1813, %v1779
      %1845 = vst.msk [vmem:[%s302 + $0x7c] sm:$0xf] %vm1813, %v1780
      %1846 = vst.msk [vmem:[%s302 + $0x80] sm:$0xf] %vm1813, %v1781
      %1847 = vst.msk [vmem:[%s302 + $0x84] sm:$0xf] %vm1813, %v1782
      %1848 = vst.msk [vmem:[%s302 + $0x88] sm:$0xf] %vm1813, %v1783
      %1849 = vst.msk [vmem:[%s302 + $0x8c] sm:$0xf] %vm1813, %v1784
      %1850 = vst.msk [vmem:[%s302 + $0x90] sm:$0xf] %vm1813, %v1785
      %1851 = vst.msk [vmem:[%s302 + $0x94] sm:$0xf] %vm1813, %v1786
      %1852 = vst.msk [vmem:[%s302 + $0x98] sm:$0xf] %vm1813, %v1787
      %1853 = vst.msk [vmem:[%s302 + $0x9c] sm:$0xf] %vm1813, %v1788
      %1854 = vst.msk [vmem:[%s302 + $0xa0] sm:$0xf] %vm1813, %v1789
      %1855 = vst.msk [vmem:[%s302 + $0xa4] sm:$0xf] %vm1813, %v1790
      %1856 = vst.msk [vmem:[%s302 + $0xa8] sm:$0xf] %vm1813, %v1791
      %1857 = vst.msk [vmem:[%s302 + $0xac] sm:$0xf] %vm1813, %v1792
      %1858 = vst.msk [vmem:[%s302 + $0xb0] sm:$0xf] %vm1813, %v1793
      %1859 = vst.msk [vmem:[%s302 + $0xb4] sm:$0xf] %vm1813, %v1794
      %1860 = vst.msk [vmem:[%s302 + $0xb8] sm:$0xf] %vm1813, %v1795
      %1861 = vst.msk [vmem:[%s302 + $0xbc] sm:$0xf] %vm1813, %v1796
      %1862 = vst.msk [vmem:[%s302 + $0xc0] sm:$0xf] %vm1813, %v1797
      %1863 = vst.msk [vmem:[%s302 + $0xc4] sm:$0xf] %vm1813, %v1798
      %1864 = vst.msk [vmem:[%s302 + $0xc8] sm:$0xf] %vm1813, %v1799
      %1865 = vst.msk [vmem:[%s302 + $0xcc] sm:$0xf] %vm1813, %v1800
      %1866 = vst.msk [vmem:[%s302 + $0xd0] sm:$0xf] %vm1813, %v1801
      %1867 = vst.msk [vmem:[%s302 + $0xd4] sm:$0xf] %vm1813, %v1802
      %1868 = vst.msk [vmem:[%s302 + $0xd8] sm:$0xf] %vm1813, %v1803
      %1869 = vst.msk [vmem:[%s302 + $0xdc] sm:$0xf] %vm1813, %v1804
      %1870 = vst.msk [vmem:[%s302 + $0xe0] sm:$0xf] %vm1813, %v1805
      %1871 = vst.msk [vmem:[%s302 + $0xe4] sm:$0xf] %vm1813, %v1806
      %1872 = vst.msk [vmem:[%s302 + $0xe8] sm:$0xf] %vm1813, %v1807
      %1873 = vst.msk [vmem:[%s302 + $0xec] sm:$0xf] %vm1813, %v1808
      %1874 = vst.msk [vmem:[%s302 + $0xf0] sm:$0xf] %vm1813, %v1809
      %1875 = vst.msk [vmem:[%s302 + $0xf4] sm:$0xf] %vm1813, %v1810
      %1876 = vst.msk [vmem:[%s302 + $0xf8] sm:$0xf] %vm1813, %v1811
      %1877 = vst.msk [vmem:[%s302 + $0xfc] sm:$0xf] %vm1813, %v1812
      %s1878 = smul.u32 64, %s18
      %p1879 = scmp.lt.s32.totalorder %s1878, 255
      %s1880 = scalar_select %p1879, %s1878, 255
      %s1881 = smul.addr %s1880, 4
      %s1882 = scalar_lea.vmem %s7, %s1881
      // Predicated region
      $region49: #{tpu_custom_call.1} parent=47 // pred_check
        %p1883 = pneg %p193
      $region50: #{tpu_custom_call.1} parent=47 // pred_check_branch
        %1885 = sbr.rel (%p1883) target = $region52
      $region51: #{tpu_custom_call.1} parent=47 // pred_region
        %s1886 = smul.u32 64, %s18
      $region52: #{tpu_custom_call.1} parent=47 // pred_fallthru
        _
    $region48: #{tpu_custom_call.1} parent=5 // pred_fallthru
      _
    %p1887 = scmp.le.s32.totalorder 2, %s13
    // Predicated region
    $region53: #{tpu_custom_call.1} parent=5 // pred_check
      %p1888 = pneg %p1887
    $region54: #{tpu_custom_call.1} parent=5 // pred_check_branch
      %1890 = sbr.rel (%p1888) target = $region56
    $region55: #{tpu_custom_call.1} parent=5 // pred_region
      %s1891 = ssub.s32 %s13, 2
      // Predicated region
      $region57: #{tpu_custom_call.1} parent=55 // pred_check
        %p1892 = pneg %p199
      $region58: #{tpu_custom_call.1} parent=55 // pred_check_branch
        %1894 = sbr.rel (%p1892) target = $region60
      $region59: #{tpu_custom_call.1} parent=55 // pred_region
        %s1895 = smul.u32 64, %s19
        %p1896 = scmp.lt.s32.totalorder %s1895, 255
        %s1897 = scalar_select %p1896, %s1895, 255
        %s1898 = smul.addr %s1897, 4
        %s1899 = scalar_lea.vmem %s7, %s1898
      $region60: #{tpu_custom_call.1} parent=55 // pred_fallthru
        _
    $region56: #{tpu_custom_call.1} parent=5 // pred_fallthru
      _
  $region6: #{tpu_custom_call.1} parent=0 // loop_footer
    %s17 = sadd.s32 1, %s13
  $region7: #{tpu_custom_call.1} parent=0 // loop_footer_branch
    %12 = sbr.rel target = $region3
  $region8: #{tpu_custom_call.1} parent=0 // loop_exit
    _

</llo_original>
